<compile_context>
chip_gen: v5e
topology: v5e:2x2
jax: 0.10.0
libtpu: 0.0.40
codegen_flags: <defaults>
</compile_context>

<pallas_src>
import functools

import jax
import jax.numpy as jnp
import numpy as np
from jax import lax
from jax.experimental import pallas as pl
from jax.experimental.pallas import tpu as pltpu


def _round_up(x, m):
    return ((x + m - 1) // m) * m


# ---------------------------------------------------------------------------
# Pass 1: shifted-matmul conv (k*k accumulating MXU matmuls) + masked per-tile
#         BN partial statistics, computed from the f32 accumulator.
# ---------------------------------------------------------------------------
def _conv_stats_kernel(xa_ref, xb_ref, w_ref, mask_ref, y_ref, st_ref, win_ref,
                       *, offsets):
    # xa_ref  : (TM, C1)       bf16  flat input rows [i*TM, (i+1)*TM)
    # xb_ref  : (HP, C1)       bf16  halo rows [(i+1)*TM, (i+1)*TM + HP)
    # w_ref   : (k*k, C1, TN)  bf16  per-tap weight slices
    # mask_ref: (TM, 1)        f32   1.0 for valid output rows, else 0.0
    # y_ref   : (TM, TN)       bf16  conv output tile (bf16 intermediate)
    # st_ref  : (1, 2, TN)     f32   per-tile [sum, sum_sq] over valid rows
    # win_ref : (TM+HP, C1)    f32   VMEM scratch: contiguous row window
    tm = xa_ref.shape[0]
    hp = xb_ref.shape[0]

    win_ref[0:tm, :] = xa_ref[...].astype(jnp.float32)
    win_ref[tm:tm + hp, :] = xb_ref[...].astype(jnp.float32)

    acc = jnp.zeros(y_ref.shape, jnp.float32)
    for t, off in enumerate(offsets):
        tap = win_ref[off:off + tm, :].astype(jnp.bfloat16)   # (TM, C1)
        acc = acc + jnp.dot(tap, w_ref[t],
                            preferred_element_type=jnp.float32)

    y_ref[...] = acc.astype(y_ref.dtype)                      # bf16 store

    ym = acc * mask_ref[...]                                  # masked, f32
    st_ref[:, 0:1, :] = jnp.sum(ym, axis=0, keepdims=True)[None]
    st_ref[:, 1:2, :] = jnp.sum(ym * acc, axis=0, keepdims=True)[None]


# ---------------------------------------------------------------------------
# Pass 2: y * scale + shift, ReLU  (per-channel scale/shift precomputed).
# ---------------------------------------------------------------------------
def _bn_relu_kernel(y_ref, scale_ref, shift_ref, o_ref):
    y = y_ref[...].astype(jnp.float32)         # f32 VPU math (v5e-safe)
    o_ref[...] = jnp.maximum(y * scale_ref[...] + shift_ref[...],
                             0.0).astype(o_ref.dtype)


def conv_module_forward(x_nchw, weight_oihw, gamma, beta, *, k, s, p,
                        eps=1e-3, block_m=512):
    """ConvModule.forward: Conv2d(bias=False, groups=1) -> BN(train) -> ReLU."""
    N, C1, H, W = x_nchw.shape
    C2 = weight_oihw.shape[0]
    Ho = (H + 2 * p - k) // s + 1
    Wo = (W + 2 * p - k) // s + 1
    Hpp, Wpp = H + 2 * p, W + 2 * p
    M = N * Ho * Wo                      # valid conv outputs (BN normalizer)
    Mfull = N * Hpp * Wpp                # rows evaluated by the shifted conv
    T = k * k
    f32 = jnp.float32

    C2p = _round_up(C2, 128)             # lane-dense output channels
    TN = 256 if C2p % 256 == 0 else 128  # 256-wide tiles feed v6e/v7x MXU
    halo = (k - 1) * Wpp + (k - 1)       # max tap row offset
    TM = _round_up(max(block_m, halo, 256), 256)
    Mpad = _round_up(Mfull, TM)
    num_i = Mpad // TM
    num_j = C2p // TN

    # Halo block: smallest multiple of 16 that divides TM and covers `halo`.
    HP = TM
    for d in range(16, TM + 1, 16):
        if TM % d == 0 and d >= max(halo, 16):
            HP = d
            break

    # ---- wrapper glue: layout only (pad / flatten / fold weights / mask) ----
    x_nhwc = jnp.transpose(x_nchw, (0, 2, 3, 1))
    x_pad = jnp.pad(x_nhwc, ((0, 0), (p, p), (p, p), (0, 0)))
    x_flat = x_pad.reshape(Mfull, C1)
    # + TM extra zero rows so the halo block of the last tile stays in bounds.
    x_flat = jnp.pad(x_flat, ((0, Mpad + TM - Mfull), (0, 0))).astype(jnp.bfloat16)

    # Per-tap weights: OIHW -> (kh, kw, cin, cout) -> (k*k, C1, C2p).
    w_taps = jnp.transpose(weight_oihw, (2, 3, 1, 0)).reshape(T, C1, C2)
    w_taps = jnp.pad(w_taps, ((0, 0), (0, 0), (0, C2p - C2))).astype(jnp.bfloat16)

    # Validity mask over the padded grid (only real output positions count
    # towards the batch statistics).
    hh = jnp.arange(Hpp)
    ww = jnp.arange(Wpp)
    hv = ((hh % s) == 0) & ((hh // s) < Ho)
    wv = ((ww % s) == 0) & ((ww // s) < Wo)
    mask2d = (hv[:, None] & wv[None, :]).astype(f32)           # (Hpp, Wpp)
    mask = jnp.broadcast_to(mask2d[None], (N, Hpp, Wpp)).reshape(Mfull, 1)
    mask = jnp.pad(mask, ((0, Mpad - Mfull), (0, 0)))

    offsets = tuple(kh * Wpp + kw for kh in range(k) for kw in range(k))

    # Pass-2 row tile: bigger (pure HBM roofline), must divide Mpad.
    if Mpad <= 2048:
        TM2 = Mpad
    elif Mpad % 2048 == 0:
        TM2 = 2048
    elif Mpad % 1024 == 0:
        TM2 = 1024
    elif Mpad % 512 == 0:
        TM2 = 512
    else:
        TM2 = TM
    num_i2 = Mpad // TM2

    # ---- explicit VMEM budget (double-buffered blocks + scratch/acc) --------
    def nbytes(shape, itemsize):
        return int(np.prod(shape)) * itemsize
    est1 = (2 * (nbytes((TM, C1), 2) + nbytes((HP, C1), 2)
                 + nbytes((T, C1, TN), 2)
                 + nbytes((TM, 1), 4)
                 + nbytes((TM, TN), 2)
                 + nbytes((1, 2, TN), 4))
            + nbytes((TM + HP, C1), 4)
            + 2 * nbytes((TM, TN), 4))
    est2 = 2 * (nbytes((TM2, C2p), 2) + nbytes((TM2, C2p), 4)
                + 2 * nbytes((1, C2p), 4))
    vmem_limit = int(min(64 * 2 ** 20, max(32 * 2 ** 20, 2 * max(est1, est2))))

    # ---- pass 1: conv (k*k shifted matmuls) + per-tile partial BN stats -----
    y, stats = pl.pallas_call(
        functools.partial(_conv_stats_kernel, offsets=offsets),
        out_shape=(jax.ShapeDtypeStruct((Mpad, C2p), jnp.bfloat16),
                   jax.ShapeDtypeStruct((num_i, 2, C2p), f32)),
        grid=(num_i, num_j),
        in_specs=[
            pl.BlockSpec((TM, C1), lambda i, j: (i, 0)),
            pl.BlockSpec((HP, C1), lambda i, j: ((i + 1) * (TM // HP), 0)),
            pl.BlockSpec((T, C1, TN), lambda i, j: (0, 0, j)),
            pl.BlockSpec((TM, 1), lambda i, j: (i, 0)),
        ],
        out_specs=[
            pl.BlockSpec((TM, TN), lambda i, j: (i, j)),
            pl.BlockSpec((1, 2, TN), lambda i, j: (i, 0, j)),
        ],
        scratch_shapes=[pltpu.VMEM((TM + HP, C1), f32)],
        compiler_params=pltpu.CompilerParams(
            dimension_semantics=("parallel", "parallel"),
            vmem_limit_bytes=vmem_limit),
    )(x_flat, x_flat, w_taps, mask)

    # ---- tiny per-channel finalize (wrapper, f32) ---------------------------
    tot = jnp.sum(stats, axis=0)                      # (2, C2p)
    mean = tot[0] / M
    # Single-pass variance; clamped at 0.  TODO(synk): use mean-centered
    # per-tile partials if fed large-magnitude unnormalized activations.
    var = jnp.maximum(tot[1] / M - mean * mean, 0.0)
    inv_std = lax.rsqrt(var + eps)
    gamma_p = jnp.pad(gamma.astype(f32), (0, C2p - C2))
    beta_p = jnp.pad(beta.astype(f32), (0, C2p - C2))
    scale = (gamma_p * inv_std).reshape(1, C2p)
    shift = (beta_p - mean * gamma_p * inv_std).reshape(1, C2p)

    # ---- pass 2: normalize + ReLU (lane-dense elementwise, big row tiles) ---
    out_flat = pl.pallas_call(
        _bn_relu_kernel,
        out_shape=jax.ShapeDtypeStruct((Mpad, C2p), f32),
        grid=(num_i2,),
        in_specs=[
            pl.BlockSpec((TM2, C2p), lambda i: (i, 0)),
            pl.BlockSpec((1, C2p), lambda i: (0, 0)),
            pl.BlockSpec((1, C2p), lambda i: (0, 0)),
        ],
        out_specs=pl.BlockSpec((TM2, C2p), lambda i: (i, 0)),
        compiler_params=pltpu.CompilerParams(
            dimension_semantics=("parallel",),
            vmem_limit_bytes=vmem_limit),
    )(y, scale, shift)

    # ---- epilogue: pick valid rows and relayout NHWC -> NCHW (one XLA copy) -
    out_nhwc = out_flat[:Mfull].reshape(N, Hpp, Wpp, C2p)
    out_nhwc = out_nhwc[:, :(Ho - 1) * s + 1:s, :(Wo - 1) * s + 1:s, :C2]
    return jnp.transpose(out_nhwc, (0, 3, 1, 2)).astype(x_nchw.dtype)


def _reference(x_nchw, weight_oihw, gamma, beta, *, k, s, p, eps=1e-3):
    y = lax.conv_general_dilated(
        x_nchw, weight_oihw, window_strides=(s, s),
        padding=[(p, p), (p, p)],
        dimension_numbers=("NCHW", "OIHW", "NCHW"))
    mean = jnp.mean(y, axis=(0, 2, 3), keepdims=True)
    var = jnp.mean(jnp.square(y - mean), axis=(0, 2, 3), keepdims=True)
    yn = (y - mean) * lax.rsqrt(var + eps)
    yn = yn * gamma.reshape(1, -1, 1, 1) + beta.reshape(1, -1, 1, 1)
    return jnp.maximum(yn, 0.0)


if __name__ == "__main__":
    # ConvModule(c1=4, c2=8, k=3, s=1, p=1, g=1, act=True)
    N, C1, H, W = 2, 4, 16, 16
    C2, K, S, P = 8, 3, 1, 1

    key = jax.random.PRNGKey(0)
    kx, kw, kg, kb = jax.random.split(key, 4)
    x = jax.random.normal(kx, (N, C1, H, W), dtype=jnp.float32)
    weight = 0.1 * jax.random.normal(kw, (C2, C1, K, K), dtype=jnp.float32)
    gamma = 1.0 + 0.1 * jax.random.normal(kg, (C2,), dtype=jnp.float32)
    beta = 0.1 * jax.random.normal(kb, (C2,), dtype=jnp.float32)

    # block_m=256 -> 3 grid steps in pass 1 at this toy size (real pipelining).
    out = conv_module_forward(x, weight, gamma, beta, k=K, s=S, p=P,
                              block_m=256)
    out = jax.block_until_ready(out)

    ref = _reference(x, weight, gamma, beta, k=K, s=S, p=P)
    # Tolerance covers bf16 MXU operands and the bf16 intermediate `y`
    # (stats and BN scale/shift math stay in f32).
    np.testing.assert_allclose(np.asarray(out), np.asarray(ref),
                               rtol=2e-2, atol=2e-2)

    print("KERNEL_OK")
</pallas_src>

<mosaic_0001>
module attributes {stable_mosaic.version = 11 : i64} {
  func.func @_conv_stats_kernel(%arg0: i32, %arg1: i32, %arg2: memref<256x4xbf16, #tpu.memory_space<vmem>>, %arg3: memref<64x4xbf16, #tpu.memory_space<vmem>>, %arg4: memref<9x4x128xbf16, #tpu.memory_space<vmem>>, %arg5: memref<256x1xf32, #tpu.memory_space<vmem>>, %arg6: memref<256x128xbf16, #tpu.memory_space<vmem>>, %arg7: memref<1x2x128xf32, #tpu.memory_space<vmem>>, %arg8: memref<320x4xf32, #tpu.memory_space<vmem>>) attributes {dimension_semantics = [#tpu.dimension_semantics<parallel>, #tpu.dimension_semantics<parallel>], iteration_bounds = array<i64: 3, 1>, scalar_prefetch = 0 : i64, scratch_operands = 1 : i64, tpu.core_type = #tpu.core_type<tc>, window_params = [{transform_indices = @transform_0, window_bounds = array<i64: 256, 4>}, {transform_indices = @transform_1, window_bounds = array<i64: 64, 4>}, {transform_indices = @transform_2, window_bounds = array<i64: 9, 4, 128>}, {transform_indices = @transform_3, window_bounds = array<i64: 256, 1>}, {transform_indices = @transform_4, window_bounds = array<i64: 256, 128>}, {transform_indices = @transform_5, window_bounds = array<i64: 1, 2, 128>}]} {
    %c0 = arith.constant 0 : index
    %c0_0 = arith.constant 0 : index
    %0 = vector.load %arg2[%c0, %c0_0] : memref<256x4xbf16, #tpu.memory_space<vmem>>, vector<256x4xbf16>
    %1 = arith.extf %0 : vector<256x4xbf16> to vector<256x4xf32>
    %c0_1 = arith.constant 0 : index
    %c0_2 = arith.constant 0 : index
    %2 = vector.load %arg8[%c0_1, %c0_2] : memref<320x4xf32, #tpu.memory_space<vmem>>, vector<256x4xf32>
    tpu.vector_store %arg8[%c0_1, %c0_2], %1 {strides = array<i32>} : memref<320x4xf32, #tpu.memory_space<vmem>>, vector<256x4xf32>,
    %c0_3 = arith.constant 0 : index
    %c0_4 = arith.constant 0 : index
    %3 = vector.load %arg3[%c0_3, %c0_4] : memref<64x4xbf16, #tpu.memory_space<vmem>>, vector<64x4xbf16>
    %4 = arith.extf %3 : vector<64x4xbf16> to vector<64x4xf32>
    %c256 = arith.constant 256 : index
    %c0_5 = arith.constant 0 : index
    %5 = vector.load %arg8[%c256, %c0_5] : memref<320x4xf32, #tpu.memory_space<vmem>>, vector<64x4xf32>
    tpu.vector_store %arg8[%c256, %c0_5], %4 {strides = array<i32>} : memref<320x4xf32, #tpu.memory_space<vmem>>, vector<64x4xf32>,
    %cst = arith.constant 0.000000e+00 : f32
    %6 = vector.broadcast %cst : f32 to vector<256x128xf32>
    %c0_6 = arith.constant 0 : index
    %c0_7 = arith.constant 0 : index
    %7 = vector.load %arg8[%c0_6, %c0_7] : memref<320x4xf32, #tpu.memory_space<vmem>>, vector<256x4xf32>
    %8 = arith.truncf %7 : vector<256x4xf32> to vector<256x4xbf16>
    %c0_8 = arith.constant 0 : index
    %c0_9 = arith.constant 0 : index
    %c0_10 = arith.constant 0 : index
    %9 = vector.load %arg4[%c0_8, %c0_9, %c0_10] : memref<9x4x128xbf16, #tpu.memory_space<vmem>>, vector<1x4x128xbf16>
    %10 = vector.shape_cast %9 : vector<1x4x128xbf16> to vector<4x128xbf16>
    %cst_11 = arith.constant dense<0.000000e+00> : vector<256x128xf32>
    %11 = tpu.matmul %8, %10, %cst_11 {dimension_numbers = #tpu.dot_dimension_numbers<[1], [0], [0], [1], [0, 0, 1, 1], [], []>} : vector<256x4xbf16>, vector<4x128xbf16>, vector<256x128xf32> -> vector<256x128xf32>
    %12 = arith.addf %6, %11 : vector<256x128xf32>
    %c1 = arith.constant 1 : index
    %c0_12 = arith.constant 0 : index
    %13 = vector.load %arg8[%c1, %c0_12] : memref<320x4xf32, #tpu.memory_space<vmem>>, vector<256x4xf32>
    %14 = arith.truncf %13 : vector<256x4xf32> to vector<256x4xbf16>
    %c1_13 = arith.constant 1 : index
    %c0_14 = arith.constant 0 : index
    %c0_15 = arith.constant 0 : index
    %15 = vector.load %arg4[%c1_13, %c0_14, %c0_15] : memref<9x4x128xbf16, #tpu.memory_space<vmem>>, vector<1x4x128xbf16>
    %16 = vector.shape_cast %15 : vector<1x4x128xbf16> to vector<4x128xbf16>
    %cst_16 = arith.constant dense<0.000000e+00> : vector<256x128xf32>
    %17 = tpu.matmul %14, %16, %cst_16 {dimension_numbers = #tpu.dot_dimension_numbers<[1], [0], [0], [1], [0, 0, 1, 1], [], []>} : vector<256x4xbf16>, vector<4x128xbf16>, vector<256x128xf32> -> vector<256x128xf32>
    %18 = arith.addf %12, %17 : vector<256x128xf32>
    %c2 = arith.constant 2 : index
    %c0_17 = arith.constant 0 : index
    %19 = vector.load %arg8[%c2, %c0_17] : memref<320x4xf32, #tpu.memory_space<vmem>>, vector<256x4xf32>
    %20 = arith.truncf %19 : vector<256x4xf32> to vector<256x4xbf16>
    %c2_18 = arith.constant 2 : index
    %c0_19 = arith.constant 0 : index
    %c0_20 = arith.constant 0 : index
    %21 = vector.load %arg4[%c2_18, %c0_19, %c0_20] : memref<9x4x128xbf16, #tpu.memory_space<vmem>>, vector<1x4x128xbf16>
    %22 = vector.shape_cast %21 : vector<1x4x128xbf16> to vector<4x128xbf16>
    %cst_21 = arith.constant dense<0.000000e+00> : vector<256x128xf32>
    %23 = tpu.matmul %20, %22, %cst_21 {dimension_numbers = #tpu.dot_dimension_numbers<[1], [0], [0], [1], [0, 0, 1, 1], [], []>} : vector<256x4xbf16>, vector<4x128xbf16>, vector<256x128xf32> -> vector<256x128xf32>
    %24 = arith.addf %18, %23 : vector<256x128xf32>
    %c18 = arith.constant 18 : index
    %c0_22 = arith.constant 0 : index
    %25 = vector.load %arg8[%c18, %c0_22] : memref<320x4xf32, #tpu.memory_space<vmem>>, vector<256x4xf32>
    %26 = arith.truncf %25 : vector<256x4xf32> to vector<256x4xbf16>
    %c3 = arith.constant 3 : index
    %c0_23 = arith.constant 0 : index
    %c0_24 = arith.constant 0 : index
    %27 = vector.load %arg4[%c3, %c0_23, %c0_24] : memref<9x4x128xbf16, #tpu.memory_space<vmem>>, vector<1x4x128xbf16>
    %28 = vector.shape_cast %27 : vector<1x4x128xbf16> to vector<4x128xbf16>
    %cst_25 = arith.constant dense<0.000000e+00> : vector<256x128xf32>
    %29 = tpu.matmul %26, %28, %cst_25 {dimension_numbers = #tpu.dot_dimension_numbers<[1], [0], [0], [1], [0, 0, 1, 1], [], []>} : vector<256x4xbf16>, vector<4x128xbf16>, vector<256x128xf32> -> vector<256x128xf32>
    %30 = arith.addf %24, %29 : vector<256x128xf32>
    %c19 = arith.constant 19 : index
    %c0_26 = arith.constant 0 : index
    %31 = vector.load %arg8[%c19, %c0_26] : memref<320x4xf32, #tpu.memory_space<vmem>>, vector<256x4xf32>
    %32 = arith.truncf %31 : vector<256x4xf32> to vector<256x4xbf16>
    %c4 = arith.constant 4 : index
    %c0_27 = arith.constant 0 : index
    %c0_28 = arith.constant 0 : index
    %33 = vector.load %arg4[%c4, %c0_27, %c0_28] : memref<9x4x128xbf16, #tpu.memory_space<vmem>>, vector<1x4x128xbf16>
    %34 = vector.shape_cast %33 : vector<1x4x128xbf16> to vector<4x128xbf16>
    %cst_29 = arith.constant dense<0.000000e+00> : vector<256x128xf32>
    %35 = tpu.matmul %32, %34, %cst_29 {dimension_numbers = #tpu.dot_dimension_numbers<[1], [0], [0], [1], [0, 0, 1, 1], [], []>} : vector<256x4xbf16>, vector<4x128xbf16>, vector<256x128xf32> -> vector<256x128xf32>
    %36 = arith.addf %30, %35 : vector<256x128xf32>
    %c20 = arith.constant 20 : index
    %c0_30 = arith.constant 0 : index
    %37 = vector.load %arg8[%c20, %c0_30] : memref<320x4xf32, #tpu.memory_space<vmem>>, vector<256x4xf32>
    %38 = arith.truncf %37 : vector<256x4xf32> to vector<256x4xbf16>
    %c5 = arith.constant 5 : index
    %c0_31 = arith.constant 0 : index
    %c0_32 = arith.constant 0 : index
    %39 = vector.load %arg4[%c5, %c0_31, %c0_32] : memref<9x4x128xbf16, #tpu.memory_space<vmem>>, vector<1x4x128xbf16>
    %40 = vector.shape_cast %39 : vector<1x4x128xbf16> to vector<4x128xbf16>
    %cst_33 = arith.constant dense<0.000000e+00> : vector<256x128xf32>
    %41 = tpu.matmul %38, %40, %cst_33 {dimension_numbers = #tpu.dot_dimension_numbers<[1], [0], [0], [1], [0, 0, 1, 1], [], []>} : vector<256x4xbf16>, vector<4x128xbf16>, vector<256x128xf32> -> vector<256x128xf32>
    %42 = arith.addf %36, %41 : vector<256x128xf32>
    %c36 = arith.constant 36 : index
    %c0_34 = arith.constant 0 : index
    %43 = vector.load %arg8[%c36, %c0_34] : memref<320x4xf32, #tpu.memory_space<vmem>>, vector<256x4xf32>
    %44 = arith.truncf %43 : vector<256x4xf32> to vector<256x4xbf16>
    %c6 = arith.constant 6 : index
    %c0_35 = arith.constant 0 : index
    %c0_36 = arith.constant 0 : index
    %45 = vector.load %arg4[%c6, %c0_35, %c0_36] : memref<9x4x128xbf16, #tpu.memory_space<vmem>>, vector<1x4x128xbf16>
    %46 = vector.shape_cast %45 : vector<1x4x128xbf16> to vector<4x128xbf16>
    %cst_37 = arith.constant dense<0.000000e+00> : vector<256x128xf32>
    %47 = tpu.matmul %44, %46, %cst_37 {dimension_numbers = #tpu.dot_dimension_numbers<[1], [0], [0], [1], [0, 0, 1, 1], [], []>} : vector<256x4xbf16>, vector<4x128xbf16>, vector<256x128xf32> -> vector<256x128xf32>
    %48 = arith.addf %42, %47 : vector<256x128xf32>
    %c37 = arith.constant 37 : index
    %c0_38 = arith.constant 0 : index
    %49 = vector.load %arg8[%c37, %c0_38] : memref<320x4xf32, #tpu.memory_space<vmem>>, vector<256x4xf32>
    %50 = arith.truncf %49 : vector<256x4xf32> to vector<256x4xbf16>
    %c7 = arith.constant 7 : index
    %c0_39 = arith.constant 0 : index
    %c0_40 = arith.constant 0 : index
    %51 = vector.load %arg4[%c7, %c0_39, %c0_40] : memref<9x4x128xbf16, #tpu.memory_space<vmem>>, vector<1x4x128xbf16>
    %52 = vector.shape_cast %51 : vector<1x4x128xbf16> to vector<4x128xbf16>
    %cst_41 = arith.constant dense<0.000000e+00> : vector<256x128xf32>
    %53 = tpu.matmul %50, %52, %cst_41 {dimension_numbers = #tpu.dot_dimension_numbers<[1], [0], [0], [1], [0, 0, 1, 1], [], []>} : vector<256x4xbf16>, vector<4x128xbf16>, vector<256x128xf32> -> vector<256x128xf32>
    %54 = arith.addf %48, %53 : vector<256x128xf32>
    %c38 = arith.constant 38 : index
    %c0_42 = arith.constant 0 : index
    %55 = vector.load %arg8[%c38, %c0_42] : memref<320x4xf32, #tpu.memory_space<vmem>>, vector<256x4xf32>
    %56 = arith.truncf %55 : vector<256x4xf32> to vector<256x4xbf16>
    %c8 = arith.constant 8 : index
    %c0_43 = arith.constant 0 : index
    %c0_44 = arith.constant 0 : index
    %57 = vector.load %arg4[%c8, %c0_43, %c0_44] : memref<9x4x128xbf16, #tpu.memory_space<vmem>>, vector<1x4x128xbf16>
    %58 = vector.shape_cast %57 : vector<1x4x128xbf16> to vector<4x128xbf16>
    %cst_45 = arith.constant dense<0.000000e+00> : vector<256x128xf32>
    %59 = tpu.matmul %56, %58, %cst_45 {dimension_numbers = #tpu.dot_dimension_numbers<[1], [0], [0], [1], [0, 0, 1, 1], [], []>} : vector<256x4xbf16>, vector<4x128xbf16>, vector<256x128xf32> -> vector<256x128xf32>
    %60 = arith.addf %54, %59 : vector<256x128xf32>
    %61 = arith.truncf %60 : vector<256x128xf32> to vector<256x128xbf16>
    %c0_46 = arith.constant 0 : index
    %c0_47 = arith.constant 0 : index
    %62 = vector.load %arg6[%c0_46, %c0_47] : memref<256x128xbf16, #tpu.memory_space<vmem>>, vector<256x128xbf16>
    tpu.vector_store %arg6[%c0_46, %c0_47], %61 {strides = array<i32>} : memref<256x128xbf16, #tpu.memory_space<vmem>>, vector<256x128xbf16>,
    %c0_48 = arith.constant 0 : index
    %c0_49 = arith.constant 0 : index
    %63 = vector.load %arg5[%c0_48, %c0_49] : memref<256x1xf32, #tpu.memory_space<vmem>>, vector<256x1xf32>
    %64 = vector.broadcast %63 : vector<256x1xf32> to vector<256x128xf32>
    %65 = arith.mulf %60, %64 : vector<256x128xf32>
    %cst_50 = arith.constant dense<0.000000e+00> : vector<128xf32>
    %66 = vector.multi_reduction <add>, %65, %cst_50 [0] : vector<256x128xf32> to vector<128xf32>
    %67 = vector.shape_cast %66 : vector<128xf32> to vector<1x128xf32>
    %68 = vector.shape_cast %67 : vector<1x128xf32> to vector<1x1x128xf32>
    %c0_51 = arith.constant 0 : index
    %c0_52 = arith.constant 0 : index
    %c0_53 = arith.constant 0 : index
    %69 = vector.load %arg7[%c0_51, %c0_52, %c0_53] : memref<1x2x128xf32, #tpu.memory_space<vmem>>, vector<1x1x128xf32>
    tpu.vector_store %arg7[%c0_51, %c0_52, %c0_53], %68 {strides = array<i32>} : memref<1x2x128xf32, #tpu.memory_space<vmem>>, vector<1x1x128xf32>,
    %70 = arith.mulf %65, %60 : vector<256x128xf32>
    %cst_54 = arith.constant dense<0.000000e+00> : vector<128xf32>
    %71 = vector.multi_reduction <add>, %70, %cst_54 [0] : vector<256x128xf32> to vector<128xf32>
    %72 = vector.shape_cast %71 : vector<128xf32> to vector<1x128xf32>
    %73 = vector.shape_cast %72 : vector<1x128xf32> to vector<1x1x128xf32>
    %c0_55 = arith.constant 0 : index
    %c1_56 = arith.constant 1 : index
    %c0_57 = arith.constant 0 : index
    %74 = vector.load %arg7[%c0_55, %c1_56, %c0_57] : memref<1x2x128xf32, #tpu.memory_space<vmem>>, vector<1x1x128xf32>
    tpu.vector_store %arg7[%c0_55, %c1_56, %c0_57], %73 {strides = array<i32>} : memref<1x2x128xf32, #tpu.memory_space<vmem>>, vector<1x1x128xf32>,
    return
  }
  func.func @transform_0(%arg0: i32, %arg1: i32) -> (i32, i32) {
    %c0_i32 = arith.constant 0 : i32
    %c0_i32_0 = arith.constant 0 : i32
    return %arg0, %c0_i32 : i32, i32
  }
  func.func @transform_1(%arg0: i32, %arg1: i32) -> (i32, i32) {
    %c1_i32 = arith.constant 1 : i32
    %0 = arith.addi %arg0, %c1_i32 : i32
    %c4_i32 = arith.constant 4 : i32
    %1 = arith.muli %0, %c4_i32 : i32
    %c0_i32 = arith.constant 0 : i32
    %c0_i32_0 = arith.constant 0 : i32
    return %1, %c0_i32 : i32, i32
  }
  func.func @transform_2(%arg0: i32, %arg1: i32) -> (i32, i32, i32) {
    %c0_i32 = arith.constant 0 : i32
    %c0_i32_0 = arith.constant 0 : i32
    %c0_i32_1 = arith.constant 0 : i32
    return %c0_i32, %c0_i32_0, %arg1 : i32, i32, i32
  }
  func.func @transform_3(%arg0: i32, %arg1: i32) -> (i32, i32) {
    %c0_i32 = arith.constant 0 : i32
    %c0_i32_0 = arith.constant 0 : i32
    return %arg0, %c0_i32 : i32, i32
  }
  func.func @transform_4(%arg0: i32, %arg1: i32) -> (i32, i32) {
    %c0_i32 = arith.constant 0 : i32
    return %arg0, %arg1 : i32, i32
  }
  func.func @transform_5(%arg0: i32, %arg1: i32) -> (i32, i32, i32) {
    %c0_i32 = arith.constant 0 : i32
    %c0_i32_0 = arith.constant 0 : i32
    return %arg0, %c0_i32, %arg1 : i32, i32, i32
  }
}

</mosaic_0001>

<llo_original>
// kernel: tpu_custom_call.1
$region0: #{tpu_custom_call.1}
  #allocation0 [shape = 'u32[]', space=smem, size = 0x4, offset = 0x4, fixed_abs, tag = 'smem constant byte address 0x4 - core index']
  #allocation1 [shape = 'u32[72,128]{1,0:T(1,128)}', space=vmem, size = 0x9000, scoped, tag = 'internal scratch']
  #allocation2 [shape = 'f32[320,4]{1,0:T(8,128)}', space=vmem, size = 0x28000, scoped, tag = 'scratch operand']
  %s0 = inlined_call_operand.vmem [shape: bf16[1024,4], index: 0, kind: input, shape index: {}]
  %s1 = inlined_call_operand.vmem [shape: bf16[1024,4], index: 1, kind: input, shape index: {}]
  %s2 = inlined_call_operand.vmem [shape: bf16[9,4,128], index: 2, kind: input, shape index: {}]
  %s3 = inlined_call_operand.vmem [shape: f32[768,1], index: 3, kind: input, shape index: {}]
  %s4 = inlined_call_operand.hbm [shape: bf16[768,128], index: 4, kind: output, shape index: {0}]
  %s5 = inlined_call_operand.hbm [shape: f32[3,2,128], index: 5, kind: output, shape index: {1}]
  %6 = xla_tuple %s4, %s5
  %s7 = sld [smem:[#allocation0]]
  $region57: #{tpu_custom_call.1} parent=0
    _
  %s9 = ssub.s32 1, %s7
  %s10 = scalar_select 0, %s9, %s7
  $region1: #{tpu_custom_call.1} parent=0
    #allocation3 [shape = 'u8[131072]{0}', space=vmem, size = 0x20000, scoped, tag = 'output window, operand 0']
    #allocation4 [shape = 's32[2]{0}', space=sflag, size = 0x8, scoped, tag = 'scoped memory for tpu_custom_call.1']
    #allocation5 [shape = 'u8[2048]{0}', space=vmem, size = 0x800, scoped, tag = 'output window, operand 1']
    #allocation6 [shape = 's32[2]{0}', space=sflag, size = 0x8, scoped, tag = 'scoped memory for tpu_custom_call.1']
    %11 = vsyncpa [#allocation4], 0
    %s12 = scalar_lea.sflag [#allocation4], 1
    %13 = vsyncpa %s12, 0
    %14 = vsyncpa [#allocation6], 0
    %s15 = scalar_lea.sflag [#allocation6], 1
    %16 = vsyncpa %s15, 0
    loop: start=0, step=1, limit=5
    $region2: #{tpu_custom_call.1} parent=1 // loop_pre_header
      _
    $region3: #{tpu_custom_call.1} parent=1 // loop_header
      %s18 = sphi 0, %s22
      %p19 = scmp.ge.s32.totalorder %s18, 5
      %s25 = sphi 0, %s37
      %s26 = sphi 0, %s33
      %s27 = sphi 0, %s25
      %s28 = sphi 0, %s26
      %s29 = sphi 0, %s27
      %s30 = sphi 0, %s28
      %s40 = sphi 0, %s42
      %s43 = sphi 0, %s40
      %s44 = sphi 0, %s43
      %s60 = sphi 0, %s44
      %s70 = sphi 0, %s72
      %s73 = sphi 0, %s70
      %s74 = sphi 0, %s73
      %s90 = sphi 0, %s74
      %s96 = sphi 0, %s98
      %s99 = sphi 0, %s96
      %s100 = sphi 0, %s99
      %s116 = sphi 0, %s100
      %s122 = sphi 0, %s124
      %s125 = sphi 0, %s122
      %s126 = sphi 0, %s125
      %s142 = sphi 0, %s126
      %s150 = sphi 0, %s152
      %s153 = sphi 0, %s150
      %s154 = sphi 0, %s153
      %s170 = sphi 0, %s154
      %s178 = sphi 0, %s180
      %s181 = sphi 0, %s178
      %s182 = sphi 0, %s181
      %s198 = sphi 0, %s182
    $region4: #{tpu_custom_call.1} parent=1 // loop_header_branch
      %21 = sbr.rel (%p19) target = $region8
    $region5: #{tpu_custom_call.1} parent=1 // loop_body
      %s23 = ssub.s32 %s18, 1
      %s24 = ssub.s32 %s18, 2
      %s31 = sadd.s32 1, %s26
      %p32 = scmp.ge.s32.totalorder %s31, 1
      %s33 = scalar_select %p32, 0, %s31
      %s34 = sadd.s32 1, %s25
      %s35 = scalar_select %p32, %s34, %s25
      %p36 = scmp.ge.s32.totalorder %s35, 3
      %s37 = scalar_select %p36, 0, %s35
      %s38 = ssub.s32 %s25, %s37
      %p39 = scmp.eq.s32.totalorder %s38, 0
      %s41 = sadd.s32 %s40, 1
      %s42 = scalar_select %p39, %s40, %s41
      %p45 = pneg %p39
      %p46 = scmp.eq.s32.totalorder %s18, 2
      %p47 = por %p45, %p46
      %p48 = scmp.ne.s32.totalorder %s40, %s43
      %p49 = scmp.eq.s32.totalorder %s18, 0
      %p50 = por %p48, %p49
      %p51 = scmp.ne.s32.totalorder %s40, %s43
      %p52 = scmp.eq.s32.totalorder %s23, 2
      %p53 = por %p51, %p52
      %p54 = scmp.ne.s32.totalorder %s43, %s44
      %p55 = scmp.eq.s32.totalorder %s23, 0
      %p56 = por %p54, %p55
      %p57 = scmp.ne.s32.totalorder %s43, %s44
      %p58 = scmp.eq.s32.totalorder %s24, 2
      %p59 = por %p57, %p58
      %p61 = scmp.ne.s32.totalorder %s44, %s60
      %p62 = scmp.eq.s32.totalorder %s24, 0
      %p63 = por %p61, %p62
      %s64 = sadd.s32 %s25, 1
      %s65 = smul.u32 %s64, 4
      %s66 = sadd.s32 %s37, 1
      %s67 = smul.u32 %s66, 4
      %s68 = ssub.s32 %s65, %s67
      %p69 = scmp.eq.s32.totalorder %s68, 0
      %s71 = sadd.s32 %s70, 1
      %s72 = scalar_select %p69, %s70, %s71
      %p75 = pneg %p69
      %p76 = scmp.eq.s32.totalorder %s18, 2
      %p77 = por %p75, %p76
      %p78 = scmp.ne.s32.totalorder %s70, %s73
      %p79 = scmp.eq.s32.totalorder %s18, 0
      %p80 = por %p78, %p79
      %p81 = scmp.ne.s32.totalorder %s70, %s73
      %p82 = scmp.eq.s32.totalorder %s23, 2
      %p83 = por %p81, %p82
      %p84 = scmp.ne.s32.totalorder %s73, %s74
      %p85 = scmp.eq.s32.totalorder %s23, 0
      %p86 = por %p84, %p85
      %p87 = scmp.ne.s32.totalorder %s73, %s74
      %p88 = scmp.eq.s32.totalorder %s24, 2
      %p89 = por %p87, %p88
      %p91 = scmp.ne.s32.totalorder %s74, %s90
      %p92 = scmp.eq.s32.totalorder %s24, 0
      %p93 = por %p91, %p92
      %s94 = ssub.s32 %s26, %s33
      %p95 = scmp.eq.s32.totalorder %s94, 0
      %s97 = sadd.s32 %s96, 1
      %s98 = scalar_select %p95, %s96, %s97
      %p101 = pneg %p95
      %p102 = scmp.eq.s32.totalorder %s18, 2
      %p103 = por %p101, %p102
      %p104 = scmp.ne.s32.totalorder %s96, %s99
      %p105 = scmp.eq.s32.totalorder %s18, 0
      %p106 = por %p104, %p105
      %p107 = scmp.ne.s32.totalorder %s96, %s99
      %p108 = scmp.eq.s32.totalorder %s23, 2
      %p109 = por %p107, %p108
      %p110 = scmp.ne.s32.totalorder %s99, %s100
      %p111 = scmp.eq.s32.totalorder %s23, 0
      %p112 = por %p110, %p111
      %p113 = scmp.ne.s32.totalorder %s99, %s100
      %p114 = scmp.eq.s32.totalorder %s24, 2
      %p115 = por %p113, %p114
      %p117 = scmp.ne.s32.totalorder %s100, %s116
      %p118 = scmp.eq.s32.totalorder %s24, 0
      %p119 = por %p117, %p118
      %s120 = ssub.s32 %s25, %s37
      %p121 = scmp.eq.s32.totalorder %s120, 0
      %s123 = sadd.s32 %s122, 1
      %s124 = scalar_select %p121, %s122, %s123
      %p127 = pneg %p121
      %p128 = scmp.eq.s32.totalorder %s18, 2
      %p129 = por %p127, %p128
      %p130 = scmp.ne.s32.totalorder %s122, %s125
      %p131 = scmp.eq.s32.totalorder %s18, 0
      %p132 = por %p130, %p131
      %p133 = scmp.ne.s32.totalorder %s122, %s125
      %p134 = scmp.eq.s32.totalorder %s23, 2
      %p135 = por %p133, %p134
      %p136 = scmp.ne.s32.totalorder %s125, %s126
      %p137 = scmp.eq.s32.totalorder %s23, 0
      %p138 = por %p136, %p137
      %p139 = scmp.ne.s32.totalorder %s125, %s126
      %p140 = scmp.eq.s32.totalorder %s24, 2
      %p141 = por %p139, %p140
      %p143 = scmp.ne.s32.totalorder %s126, %s142
      %p144 = scmp.eq.s32.totalorder %s24, 0
      %p145 = por %p143, %p144
      %s146 = ssub.s32 %s25, %s37
      %s147 = ssub.s32 %s26, %s33
      %s148 = sor.u32 %s146, %s147
      %p149 = scmp.eq.s32.totalorder %s148, 0
      %s151 = sadd.s32 %s150, 1
      %s152 = scalar_select %p149, %s150, %s151
      %p155 = pneg %p149
      %p156 = scmp.eq.s32.totalorder %s18, 2
      %p157 = por %p155, %p156
      %p158 = scmp.ne.s32.totalorder %s150, %s153
      %p159 = scmp.eq.s32.totalorder %s18, 0
      %p160 = por %p158, %p159
      %p161 = scmp.ne.s32.totalorder %s150, %s153
      %p162 = scmp.eq.s32.totalorder %s23, 2
      %p163 = por %p161, %p162
      %p164 = scmp.ne.s32.totalorder %s153, %s154
      %p165 = scmp.eq.s32.totalorder %s23, 0
      %p166 = por %p164, %p165
      %p167 = scmp.ne.s32.totalorder %s153, %s154
      %p168 = scmp.eq.s32.totalorder %s24, 2
      %p169 = por %p167, %p168
      %p171 = scmp.ne.s32.totalorder %s154, %s170
      %p172 = scmp.eq.s32.totalorder %s24, 0
      %p173 = por %p171, %p172
      %s174 = ssub.s32 %s25, %s37
      %s175 = ssub.s32 %s26, %s33
      %s176 = sor.u32 %s174, %s175
      %p177 = scmp.eq.s32.totalorder %s176, 0
      %s179 = sadd.s32 %s178, 1
      %s180 = scalar_select %p177, %s178, %s179
      %p183 = pneg %p177
      %p184 = scmp.eq.s32.totalorder %s18, 2
      %p185 = por %p183, %p184
      %p186 = scmp.ne.s32.totalorder %s178, %s181
      %p187 = scmp.eq.s32.totalorder %s18, 0
      %p188 = por %p186, %p187
      %p189 = scmp.ne.s32.totalorder %s178, %s181
      %p190 = scmp.eq.s32.totalorder %s23, 2
      %p191 = por %p189, %p190
      %p192 = scmp.ne.s32.totalorder %s181, %s182
      %p193 = scmp.eq.s32.totalorder %s23, 0
      %p194 = por %p192, %p193
      %p195 = scmp.ne.s32.totalorder %s181, %s182
      %p196 = scmp.eq.s32.totalorder %s24, 2
      %p197 = por %p195, %p196
      %p199 = scmp.ne.s32.totalorder %s182, %s198
      %p200 = scmp.eq.s32.totalorder %s24, 0
      %p201 = por %p199, %p200
      %p202 = scmp.le.s32.totalorder 1, %s18
      %p203 = scmp.lt.s32.totalorder %s18, 4
      %p204 = pnand %p202, %p203
      %p205 = pneg %p204
      // Predicated region
      $region9: #{tpu_custom_call.1} parent=5 // pred_check
        _
      $region10: #{tpu_custom_call.1} parent=5 // pred_check_branch
        %207 = sbr.rel (%p204) target = $region12
      $region11: #{tpu_custom_call.1} parent=5 // pred_region
        %s208 = ssub.s32 %s18, 1
        // Predicated region
        $region13: #{tpu_custom_call.1} parent=11 // pred_check
          %p209 = pneg %p112
        $region14: #{tpu_custom_call.1} parent=11 // pred_check_branch
          %211 = sbr.rel (%p209) target = $region16
        $region15: #{tpu_custom_call.1} parent=11 // pred_region
          %p212 = scmp.lt.s32.totalorder %s28, 0
          %s213 = scalar_select %p212, %s28, 0
          %s214 = smul.addr %s213, 2
          %s215 = scalar_lea.vmem %s2, %s214
        $region16: #{tpu_custom_call.1} parent=11 // pred_fallthru
          _
      $region12: #{tpu_custom_call.1} parent=5 // pred_fallthru
        _
      %p216 = scmp.lt.s32.totalorder %s18, 3
      // Predicated region
      $region17: #{tpu_custom_call.1} parent=5 // pred_check
        %p217 = pneg %p216
      $region18: #{tpu_custom_call.1} parent=5 // pred_check_branch
        %219 = sbr.rel (%p217) target = $region20
      $region19: #{tpu_custom_call.1} parent=5 // pred_region
        // Predicated region
        $region21: #{tpu_custom_call.1} parent=19 // pred_check
          %p220 = pneg %p50
        $region22: #{tpu_custom_call.1} parent=19 // pred_check_branch
          %222 = sbr.rel (%p220) target = $region24
        $region23: #{tpu_custom_call.1} parent=19 // pred_region
          %s223 = smul.u32 32, %s25
          %p224 = scmp.lt.s32.totalorder %s223, 127
          %s225 = scalar_select %p224, %s223, 127
          %s226 = smul.addr %s225, 4
          %s227 = scalar_lea.vmem %s0, %s226
          %s228 = smul.u32 32, %s25
        $region24: #{tpu_custom_call.1} parent=19 // pred_fallthru
          _
        // Predicated region
        $region25: #{tpu_custom_call.1} parent=19 // pred_check
          %p229 = pneg %p80
        $region26: #{tpu_custom_call.1} parent=19 // pred_check_branch
          %231 = sbr.rel (%p229) target = $region28
        $region27: #{tpu_custom_call.1} parent=19 // pred_region
          %s232 = sadd.s32 %s25, 1
          %s233 = smul.u32 %s232, 4
          %s234 = smul.u32 8, %s233
          %p235 = scmp.lt.s32.totalorder %s234, 127
          %s236 = scalar_select %p235, %s234, 127
          %s237 = smul.addr %s236, 4
          %s238 = scalar_lea.vmem %s1, %s237
          %s239 = sadd.s32 %s25, 1
          %s240 = smul.u32 %s239, 4
          %s241 = smul.u32 8, %s240
        $region28: #{tpu_custom_call.1} parent=19 // pred_fallthru
          _
        // Predicated region
        $region29: #{tpu_custom_call.1} parent=19 // pred_check
          %p242 = pneg %p132
        $region30: #{tpu_custom_call.1} parent=19 // pred_check_branch
          %244 = sbr.rel (%p242) target = $region32
        $region31: #{tpu_custom_call.1} parent=19 // pred_region
          %s245 = smul.u32 32, %s25
          %p246 = scmp.lt.s32.totalorder %s245, 95
          %s247 = scalar_select %p246, %s245, 95
          %s248 = smul.addr %s247, 8
          %s249 = scalar_lea.vmem %s3, %s248
          %s250 = smul.u32 32, %s25
        $region32: #{tpu_custom_call.1} parent=19 // pred_fallthru
          _
      $region20: #{tpu_custom_call.1} parent=5 // pred_fallthru
        _
      %p251 = scmp.le.s32.totalorder 1, %s18
      %p252 = scmp.lt.s32.totalorder %s18, 4
      %p253 = pnand %p251, %p252
      %p254 = pneg %p253
      // Predicated region
      $region33: #{tpu_custom_call.1} parent=5 // pred_check
        _
      $region34: #{tpu_custom_call.1} parent=5 // pred_check_branch
        %256 = sbr.rel (%p253) target = $region36
      $region35: #{tpu_custom_call.1} parent=5 // pred_region
        %s257 = ssub.s32 %s18, 1
        %s258 = smul.u32 32, %s27
        %p259 = scmp.lt.s32.totalorder %s258, 127
        %s260 = scalar_select %p259, %s258, 127
        %s261 = smul.addr %s260, 4
        %s262 = scalar_lea.vmem %s0, %s261
        %p263 = pneg %p56
        %p264 = pneg %p53
        %s265 = sadd.s32 %s27, 1
        %s266 = smul.u32 %s265, 4
        %s267 = smul.u32 8, %s266
        %p268 = scmp.lt.s32.totalorder %s267, 127
        %s269 = scalar_select %p268, %s267, 127
        %s270 = smul.addr %s269, 4
        %s271 = scalar_lea.vmem %s1, %s270
        %p272 = pneg %p86
        %p273 = pneg %p83
        %p274 = scmp.lt.s32.totalorder %s28, 0
        %s275 = scalar_select %p274, %s28, 0
        %s276 = smul.addr %s275, 2
        %s277 = scalar_lea.vmem %s2, %s276
        %p278 = pneg %p112
        %p279 = pneg %p109
        %s280 = smul.u32 32, %s27
        %p281 = scmp.lt.s32.totalorder %s280, 95
        %s282 = scalar_select %p281, %s280, 95
        %s283 = smul.addr %s282, 8
        %s284 = scalar_lea.vmem %s3, %s283
        %p285 = pneg %p138
        %p286 = pneg %p135
        %p287 = pneg %p166
        %p288 = pneg %p163
        %s289 = sand.u32 %s153, 1
        %s290 = scalar_lea.sflag [#allocation4], %s289
        %s291 = sand.u32 %s153, 1
        %s292 = smul.addr %s291, 128
        %s293 = scalar_lea.vmem [#allocation3], %s292
        %p294 = pneg %p194
        %p295 = pneg %p191
        %s296 = sand.u32 %s181, 1
        %s297 = scalar_lea.sflag [#allocation6], %s296
        %s298 = sand.u32 %s181, 1
        %s299 = smul.addr %s298, 2
        %s300 = scalar_lea.vmem [#allocation5], %s299
        %s301 = smul.u32 32, %s27
        %p302 = scmp.lt.s32.totalorder %s301, 127
        %s303 = scalar_select %p302, %s301, 127
        %s304 = smul.addr %s303, 4
        %s305 = scalar_lea.vmem %s0, %s304
        %s306 = smul.u32 32, %s27
        %s307 = sadd.s32 %s27, 1
        %s308 = smul.u32 %s307, 4
        %s309 = smul.u32 8, %s308
        %p310 = scmp.lt.s32.totalorder %s309, 127
        %s311 = scalar_select %p310, %s309, 127
        %s312 = smul.addr %s311, 4
        %s313 = scalar_lea.vmem %s1, %s312
        %s314 = sadd.s32 %s27, 1
        %s315 = smul.u32 %s314, 4
        %s316 = smul.u32 8, %s315
        %p317 = scmp.lt.s32.totalorder %s28, 0
        %s318 = scalar_select %p317, %s28, 0
        %s319 = smul.addr %s318, 2
        %s320 = scalar_lea.vmem %s2, %s319
        %s321 = smul.u32 32, %s27
        %p322 = scmp.lt.s32.totalorder %s321, 95
        %s323 = scalar_select %p322, %s321, 95
        %s324 = smul.addr %s323, 8
        %s325 = scalar_lea.vmem %s3, %s324
        %s326 = smul.u32 32, %s27
        %s327 = smul.u32 32, %s27
        %v329 = vld [vmem:[%s305] sm:$0xf]
        %v330 = vld [vmem:[%s305 + $0x4] sm:$0xf]
        %v331 = vld [vmem:[%s305 + $0x8] sm:$0xf]
        %v332 = vld [vmem:[%s305 + $0xc] sm:$0xf]
        %v333 = vld [vmem:[%s305 + $0x10] sm:$0xf]
        %v334 = vld [vmem:[%s305 + $0x14] sm:$0xf]
        %v335 = vld [vmem:[%s305 + $0x18] sm:$0xf]
        %v336 = vld [vmem:[%s305 + $0x1c] sm:$0xf]
        %v337 = vld [vmem:[%s305 + $0x20] sm:$0xf]
        %v338 = vld [vmem:[%s305 + $0x24] sm:$0xf]
        %v339 = vld [vmem:[%s305 + $0x28] sm:$0xf]
        %v340 = vld [vmem:[%s305 + $0x2c] sm:$0xf]
        %v341 = vld [vmem:[%s305 + $0x30] sm:$0xf]
        %v342 = vld [vmem:[%s305 + $0x34] sm:$0xf]
        %v343 = vld [vmem:[%s305 + $0x38] sm:$0xf]
        %v344 = vld [vmem:[%s305 + $0x3c] sm:$0xf]
        %v345 = vld [vmem:[%s305 + $0x40] sm:$0xf]
        %v346 = vld [vmem:[%s305 + $0x44] sm:$0xf]
        %v347 = vld [vmem:[%s305 + $0x48] sm:$0xf]
        %v348 = vld [vmem:[%s305 + $0x4c] sm:$0xf]
        %v349 = vld [vmem:[%s305 + $0x50] sm:$0xf]
        %v350 = vld [vmem:[%s305 + $0x54] sm:$0xf]
        %v351 = vld [vmem:[%s305 + $0x58] sm:$0xf]
        %v352 = vld [vmem:[%s305 + $0x5c] sm:$0xf]
        %v353 = vld [vmem:[%s305 + $0x60] sm:$0xf]
        %v354 = vld [vmem:[%s305 + $0x64] sm:$0xf]
        %v355 = vld [vmem:[%s305 + $0x68] sm:$0xf]
        %v356 = vld [vmem:[%s305 + $0x6c] sm:$0xf]
        %v357 = vld [vmem:[%s305 + $0x70] sm:$0xf]
        %v358 = vld [vmem:[%s305 + $0x74] sm:$0xf]
        %v359 = vld [vmem:[%s305 + $0x78] sm:$0xf]
        %v360 = vld [vmem:[%s305 + $0x7c] sm:$0xf]
        %v361 = vunpack.c.l.bf16 %v329
        %v362 = vunpack.c.l.bf16 %v330
        %v363 = vunpack.c.l.bf16 %v331
        %v364 = vunpack.c.l.bf16 %v332
        %v365 = vunpack.c.l.bf16 %v333
        %v366 = vunpack.c.l.bf16 %v334
        %v367 = vunpack.c.l.bf16 %v335
        %v368 = vunpack.c.l.bf16 %v336
        %v369 = vunpack.c.l.bf16 %v337
        %v370 = vunpack.c.l.bf16 %v338
        %v371 = vunpack.c.l.bf16 %v339
        %v372 = vunpack.c.l.bf16 %v340
        %v373 = vunpack.c.l.bf16 %v341
        %v374 = vunpack.c.l.bf16 %v342
        %v375 = vunpack.c.l.bf16 %v343
        %v376 = vunpack.c.l.bf16 %v344
        %v377 = vunpack.c.l.bf16 %v345
        %v378 = vunpack.c.l.bf16 %v346
        %v379 = vunpack.c.l.bf16 %v347
        %v380 = vunpack.c.l.bf16 %v348
        %v381 = vunpack.c.l.bf16 %v349
        %v382 = vunpack.c.l.bf16 %v350
        %v383 = vunpack.c.l.bf16 %v351
        %v384 = vunpack.c.l.bf16 %v352
        %v385 = vunpack.c.l.bf16 %v353
        %v386 = vunpack.c.l.bf16 %v354
        %v387 = vunpack.c.l.bf16 %v355
        %v388 = vunpack.c.l.bf16 %v356
        %v389 = vunpack.c.l.bf16 %v357
        %v390 = vunpack.c.l.bf16 %v358
        %v391 = vunpack.c.l.bf16 %v359
        %v392 = vunpack.c.l.bf16 %v360
        %vm393 = vcmask 31744
        %394 = vst.msk [vmem:[#allocation2] sm:$0xff] %vm393, %v361
        %395 = vst.msk [vmem:[#allocation2 + $0x8] sm:$0xff] %vm393, %v362
        %396 = vst.msk [vmem:[#allocation2 + $0x10] sm:$0xff] %vm393, %v363
        %397 = vst.msk [vmem:[#allocation2 + $0x18] sm:$0xff] %vm393, %v364
        %398 = vst.msk [vmem:[#allocation2 + $0x20] sm:$0xff] %vm393, %v365
        %399 = vst.msk [vmem:[#allocation2 + $0x28] sm:$0xff] %vm393, %v366
        %400 = vst.msk [vmem:[#allocation2 + $0x30] sm:$0xff] %vm393, %v367
        %401 = vst.msk [vmem:[#allocation2 + $0x38] sm:$0xff] %vm393, %v368
        %402 = vst.msk [vmem:[#allocation2 + $0x40] sm:$0xff] %vm393, %v369
        %403 = vst.msk [vmem:[#allocation2 + $0x48] sm:$0xff] %vm393, %v370
        %404 = vst.msk [vmem:[#allocation2 + $0x50] sm:$0xff] %vm393, %v371
        %405 = vst.msk [vmem:[#allocation2 + $0x58] sm:$0xff] %vm393, %v372
        %406 = vst.msk [vmem:[#allocation2 + $0x60] sm:$0xff] %vm393, %v373
        %407 = vst.msk [vmem:[#allocation2 + $0x68] sm:$0xff] %vm393, %v374
        %408 = vst.msk [vmem:[#allocation2 + $0x70] sm:$0xff] %vm393, %v375
        %409 = vst.msk [vmem:[#allocation2 + $0x78] sm:$0xff] %vm393, %v376
        %410 = vst.msk [vmem:[#allocation2 + $0x80] sm:$0xff] %vm393, %v377
        %411 = vst.msk [vmem:[#allocation2 + $0x88] sm:$0xff] %vm393, %v378
        %412 = vst.msk [vmem:[#allocation2 + $0x90] sm:$0xff] %vm393, %v379
        %413 = vst.msk [vmem:[#allocation2 + $0x98] sm:$0xff] %vm393, %v380
        %414 = vst.msk [vmem:[#allocation2 + $0xa0] sm:$0xff] %vm393, %v381
        %415 = vst.msk [vmem:[#allocation2 + $0xa8] sm:$0xff] %vm393, %v382
        %416 = vst.msk [vmem:[#allocation2 + $0xb0] sm:$0xff] %vm393, %v383
        %417 = vst.msk [vmem:[#allocation2 + $0xb8] sm:$0xff] %vm393, %v384
        %418 = vst.msk [vmem:[#allocation2 + $0xc0] sm:$0xff] %vm393, %v385
        %419 = vst.msk [vmem:[#allocation2 + $0xc8] sm:$0xff] %vm393, %v386
        %420 = vst.msk [vmem:[#allocation2 + $0xd0] sm:$0xff] %vm393, %v387
        %421 = vst.msk [vmem:[#allocation2 + $0xd8] sm:$0xff] %vm393, %v388
        %422 = vst.msk [vmem:[#allocation2 + $0xe0] sm:$0xff] %vm393, %v389
        %423 = vst.msk [vmem:[#allocation2 + $0xe8] sm:$0xff] %vm393, %v390
        %424 = vst.msk [vmem:[#allocation2 + $0xf0] sm:$0xff] %vm393, %v391
        %425 = vst.msk [vmem:[#allocation2 + $0xf8] sm:$0xff] %vm393, %v392
        %v426 = vld [vmem:[%s313] sm:$0xf]
        %v427 = vld [vmem:[%s313 + $0x4] sm:$0xf]
        %v428 = vld [vmem:[%s313 + $0x8] sm:$0xf]
        %v429 = vld [vmem:[%s313 + $0xc] sm:$0xf]
        %v430 = vld [vmem:[%s313 + $0x10] sm:$0xf]
        %v431 = vld [vmem:[%s313 + $0x14] sm:$0xf]
        %v432 = vld [vmem:[%s313 + $0x18] sm:$0xf]
        %v433 = vld [vmem:[%s313 + $0x1c] sm:$0xf]
        %v434 = vunpack.c.l.bf16 %v426
        %v435 = vunpack.c.l.bf16 %v427
        %v436 = vunpack.c.l.bf16 %v428
        %v437 = vunpack.c.l.bf16 %v429
        %v438 = vunpack.c.l.bf16 %v430
        %v439 = vunpack.c.l.bf16 %v431
        %v440 = vunpack.c.l.bf16 %v432
        %v441 = vunpack.c.l.bf16 %v433
        %442 = vst.msk [vmem:[#allocation2 + $0x100] sm:$0xff] %vm393, %v434
        %443 = vst.msk [vmem:[#allocation2 + $0x108] sm:$0xff] %vm393, %v435
        %444 = vst.msk [vmem:[#allocation2 + $0x110] sm:$0xff] %vm393, %v436
        %445 = vst.msk [vmem:[#allocation2 + $0x118] sm:$0xff] %vm393, %v437
        %446 = vst.msk [vmem:[#allocation2 + $0x120] sm:$0xff] %vm393, %v438
        %447 = vst.msk [vmem:[#allocation2 + $0x128] sm:$0xff] %vm393, %v439
        %448 = vst.msk [vmem:[#allocation2 + $0x130] sm:$0xff] %vm393, %v440
        %449 = vst.msk [vmem:[#allocation2 + $0x138] sm:$0xff] %vm393, %v441
        %v450 = vld [vmem:[#allocation2] sm:$0xff]
        %v451 = vld [vmem:[#allocation2 + $0x8] sm:$0xff]
        %v452 = vld [vmem:[#allocation2 + $0x10] sm:$0xff]
        %v453 = vld [vmem:[#allocation2 + $0x18] sm:$0xff]
        %v454 = vld [vmem:[#allocation2 + $0x20] sm:$0xff]
        %v455 = vld [vmem:[#allocation2 + $0x28] sm:$0xff]
        %v456 = vld [vmem:[#allocation2 + $0x30] sm:$0xff]
        %v457 = vld [vmem:[#allocation2 + $0x38] sm:$0xff]
        %v458 = vld [vmem:[#allocation2 + $0x40] sm:$0xff]
        %v459 = vld [vmem:[#allocation2 + $0x48] sm:$0xff]
        %v460 = vld [vmem:[#allocation2 + $0x50] sm:$0xff]
        %v461 = vld [vmem:[#allocation2 + $0x58] sm:$0xff]
        %v462 = vld [vmem:[#allocation2 + $0x60] sm:$0xff]
        %v463 = vld [vmem:[#allocation2 + $0x68] sm:$0xff]
        %v464 = vld [vmem:[#allocation2 + $0x70] sm:$0xff]
        %v465 = vld [vmem:[#allocation2 + $0x78] sm:$0xff]
        %v466 = vld [vmem:[#allocation2 + $0x80] sm:$0xff]
        %v467 = vld [vmem:[#allocation2 + $0x88] sm:$0xff]
        %v468 = vld [vmem:[#allocation2 + $0x90] sm:$0xff]
        %v469 = vld [vmem:[#allocation2 + $0x98] sm:$0xff]
        %v470 = vld [vmem:[#allocation2 + $0xa0] sm:$0xff]
        %v471 = vld [vmem:[#allocation2 + $0xa8] sm:$0xff]
        %v472 = vld [vmem:[#allocation2 + $0xb0] sm:$0xff]
        %v473 = vld [vmem:[#allocation2 + $0xb8] sm:$0xff]
        %v474 = vld [vmem:[#allocation2 + $0xc0] sm:$0xff]
        %v475 = vld [vmem:[#allocation2 + $0xc8] sm:$0xff]
        %v476 = vld [vmem:[#allocation2 + $0xd0] sm:$0xff]
        %v477 = vld [vmem:[#allocation2 + $0xd8] sm:$0xff]
        %v478 = vld [vmem:[#allocation2 + $0xe0] sm:$0xff]
        %v479 = vld [vmem:[#allocation2 + $0xe8] sm:$0xff]
        %v480 = vld [vmem:[#allocation2 + $0xf0] sm:$0xff]
        %v481 = vld [vmem:[#allocation2 + $0xf8] sm:$0xff]
        %v482 = vpack.c.bf16 %v451, %v450
        %v483 = vpack.c.bf16 %v453, %v452
        %v484 = vpack.c.bf16 %v455, %v454
        %v485 = vpack.c.bf16 %v457, %v456
        %v486 = vpack.c.bf16 %v459, %v458
        %v487 = vpack.c.bf16 %v461, %v460
        %v488 = vpack.c.bf16 %v463, %v462
        %v489 = vpack.c.bf16 %v465, %v464
        %v490 = vpack.c.bf16 %v467, %v466
        %v491 = vpack.c.bf16 %v469, %v468
        %v492 = vpack.c.bf16 %v471, %v470
        %v493 = vpack.c.bf16 %v473, %v472
        %v494 = vpack.c.bf16 %v475, %v474
        %v495 = vpack.c.bf16 %v477, %v476
        %v496 = vpack.c.bf16 %v479, %v478
        %v497 = vpack.c.bf16 %v481, %v480
        %v498 = vld [vmem:[%s320] sm:$0x3]
        %v499 = vld [vmem:[#allocation2 + $0x1] sm:$0xff]
        %v500 = vld [vmem:[#allocation2 + $0x9] sm:$0xff]
        %v501 = vld [vmem:[#allocation2 + $0x11] sm:$0xff]
        %v502 = vld [vmem:[#allocation2 + $0x19] sm:$0xff]
        %v503 = vld [vmem:[#allocation2 + $0x21] sm:$0xff]
        %v504 = vld [vmem:[#allocation2 + $0x29] sm:$0xff]
        %v505 = vld [vmem:[#allocation2 + $0x31] sm:$0xff]
        %v506 = vld [vmem:[#allocation2 + $0x39] sm:$0xff]
        %v507 = vld [vmem:[#allocation2 + $0x41] sm:$0xff]
        %v508 = vld [vmem:[#allocation2 + $0x49] sm:$0xff]
        %v509 = vld [vmem:[#allocation2 + $0x51] sm:$0xff]
        %v510 = vld [vmem:[#allocation2 + $0x59] sm:$0xff]
        %v511 = vld [vmem:[#allocation2 + $0x61] sm:$0xff]
        %v512 = vld [vmem:[#allocation2 + $0x69] sm:$0xff]
        %v513 = vld [vmem:[#allocation2 + $0x71] sm:$0xff]
        %v514 = vld [vmem:[#allocation2 + $0x79] sm:$0xff]
        %v515 = vld [vmem:[#allocation2 + $0x81] sm:$0xff]
        %v516 = vld [vmem:[#allocation2 + $0x89] sm:$0xff]
        %v517 = vld [vmem:[#allocation2 + $0x91] sm:$0xff]
        %v518 = vld [vmem:[#allocation2 + $0x99] sm:$0xff]
        %v519 = vld [vmem:[#allocation2 + $0xa1] sm:$0xff]
        %v520 = vld [vmem:[#allocation2 + $0xa9] sm:$0xff]
        %v521 = vld [vmem:[#allocation2 + $0xb1] sm:$0xff]
        %v522 = vld [vmem:[#allocation2 + $0xb9] sm:$0xff]
        %v523 = vld [vmem:[#allocation2 + $0xc1] sm:$0xff]
        %v524 = vld [vmem:[#allocation2 + $0xc9] sm:$0xff]
        %v525 = vld [vmem:[#allocation2 + $0xd1] sm:$0xff]
        %v526 = vld [vmem:[#allocation2 + $0xd9] sm:$0xff]
        %v527 = vld [vmem:[#allocation2 + $0xe1] sm:$0xff]
        %v528 = vld [vmem:[#allocation2 + $0xe9] sm:$0xff]
        %v529 = vld [vmem:[#allocation2 + $0xf1] sm:$0xff]
        %v530 = vld [vmem:[#allocation2 + $0xf9] sm:$0xff]
        %v531 = vpack.c.bf16 %v500, %v499
        %v532 = vpack.c.bf16 %v502, %v501
        %v533 = vpack.c.bf16 %v504, %v503
        %v534 = vpack.c.bf16 %v506, %v505
        %v535 = vpack.c.bf16 %v508, %v507
        %v536 = vpack.c.bf16 %v510, %v509
        %v537 = vpack.c.bf16 %v512, %v511
        %v538 = vpack.c.bf16 %v514, %v513
        %v539 = vpack.c.bf16 %v516, %v515
        %v540 = vpack.c.bf16 %v518, %v517
        %v541 = vpack.c.bf16 %v520, %v519
        %v542 = vpack.c.bf16 %v522, %v521
        %v543 = vpack.c.bf16 %v524, %v523
        %v544 = vpack.c.bf16 %v526, %v525
        %v545 = vpack.c.bf16 %v528, %v527
        %v546 = vpack.c.bf16 %v530, %v529
        %s547 = scalar_lea.vmem %s320, 2
        %v548 = vld [vmem:[%s547] sm:$0x3]
        %v550 = vsel %vm393, %v531, 0
        %v553 = vsel %vm393, %v532, 0
        %v556 = vsel %vm393, %v533, 0
        %v559 = vsel %vm393, %v534, 0
        %v562 = vsel %vm393, %v535, 0
        %v565 = vsel %vm393, %v536, 0
        %v568 = vsel %vm393, %v537, 0
        %v571 = vsel %vm393, %v538, 0
        %v574 = vsel %vm393, %v539, 0
        %v577 = vsel %vm393, %v540, 0
        %v580 = vsel %vm393, %v541, 0
        %v583 = vsel %vm393, %v542, 0
        %v586 = vsel %vm393, %v543, 0
        %v589 = vsel %vm393, %v544, 0
        %v592 = vsel %vm393, %v545, 0
        %v595 = vsel %vm393, %v546, 0
        %vm597 = vcmask 1041408
        %v599 = vsel %vm597, %v548, 0
        %601 = vmatpush.bf16.msra.mxu0 0
        %602 = vmatpush.bf16.msra.mxu0 0
        %603 = vmatpush.bf16.msra.mxu0 0
        %604 = vmatpush.bf16.msra.mxu0 0
        %605 = vmatpush.bf16.msra.mxu0 0
        %606 = vmatpush.bf16.msra.mxu0 0
        %607 = vmatpush.bf16.msra.mxu0 0
        %608 = vmatpush.bf16.msra.mxu0 %v599
        %609 = vmatmul.bf16.gmra.mxu0 %v550
        %v610 = vpop.f32.mrf.mxu0
        %v611 = vadd.f32 0.0, %v610
        %v612 = vpop.f32.mrf.mxu0
        %v613 = vadd.f32 0.0, %v612
        %614 = vmatmul.bf16.gmra.mxu0 %v553
        %v615 = vpop.f32.mrf.mxu0
        %v616 = vadd.f32 0.0, %v615
        %v617 = vpop.f32.mrf.mxu0
        %v618 = vadd.f32 0.0, %v617
        %619 = vmatmul.bf16.gmra.mxu0 %v556
        %v620 = vpop.f32.mrf.mxu0
        %v621 = vadd.f32 0.0, %v620
        %v622 = vpop.f32.mrf.mxu0
        %v623 = vadd.f32 0.0, %v622
        %624 = vmatmul.bf16.gmra.mxu0 %v559
        %v625 = vpop.f32.mrf.mxu0
        %v626 = vadd.f32 0.0, %v625
        %v627 = vpop.f32.mrf.mxu0
        %v628 = vadd.f32 0.0, %v627
        %629 = vmatmul.bf16.gmra.mxu0 %v562
        %v630 = vpop.f32.mrf.mxu0
        %v631 = vadd.f32 0.0, %v630
        %v632 = vpop.f32.mrf.mxu0
        %v633 = vadd.f32 0.0, %v632
        %634 = vmatmul.bf16.gmra.mxu0 %v565
        %v635 = vpop.f32.mrf.mxu0
        %v636 = vadd.f32 0.0, %v635
        %v637 = vpop.f32.mrf.mxu0
        %v638 = vadd.f32 0.0, %v637
        %639 = vmatmul.bf16.gmra.mxu0 %v568
        %v640 = vpop.f32.mrf.mxu0
        %v641 = vadd.f32 0.0, %v640
        %v642 = vpop.f32.mrf.mxu0
        %v643 = vadd.f32 0.0, %v642
        %644 = vmatmul.bf16.gmra.mxu0 %v571
        %v645 = vpop.f32.mrf.mxu0
        %v646 = vadd.f32 0.0, %v645
        %v647 = vpop.f32.mrf.mxu0
        %v648 = vadd.f32 0.0, %v647
        %649 = vmatmul.bf16.gmra.mxu0 %v574
        %v650 = vpop.f32.mrf.mxu0
        %v651 = vadd.f32 0.0, %v650
        %v652 = vpop.f32.mrf.mxu0
        %v653 = vadd.f32 0.0, %v652
        %654 = vmatmul.bf16.gmra.mxu0 %v577
        %v655 = vpop.f32.mrf.mxu0
        %v656 = vadd.f32 0.0, %v655
        %v657 = vpop.f32.mrf.mxu0
        %v658 = vadd.f32 0.0, %v657
        %659 = vmatmul.bf16.gmra.mxu0 %v580
        %v660 = vpop.f32.mrf.mxu0
        %v661 = vadd.f32 0.0, %v660
        %v662 = vpop.f32.mrf.mxu0
        %v663 = vadd.f32 0.0, %v662
        %664 = vmatmul.bf16.gmra.mxu0 %v583
        %v665 = vpop.f32.mrf.mxu0
        %v666 = vadd.f32 0.0, %v665
        %v667 = vpop.f32.mrf.mxu0
        %v668 = vadd.f32 0.0, %v667
        %669 = vmatmul.bf16.gmra.mxu0 %v586
        %v670 = vpop.f32.mrf.mxu0
        %v671 = vadd.f32 0.0, %v670
        %v672 = vpop.f32.mrf.mxu0
        %v673 = vadd.f32 0.0, %v672
        %674 = vmatmul.bf16.gmra.mxu0 %v589
        %v675 = vpop.f32.mrf.mxu0
        %v676 = vadd.f32 0.0, %v675
        %v677 = vpop.f32.mrf.mxu0
        %v678 = vadd.f32 0.0, %v677
        %679 = vmatmul.bf16.gmra.mxu0 %v592
        %v680 = vpop.f32.mrf.mxu0
        %v681 = vadd.f32 0.0, %v680
        %v682 = vpop.f32.mrf.mxu0
        %v683 = vadd.f32 0.0, %v682
        %684 = vmatmul.bf16.gmra.mxu0 %v595
        %v685 = vpop.f32.mrf.mxu0
        %v686 = vadd.f32 0.0, %v685
        %v687 = vpop.f32.mrf.mxu0
        %v688 = vadd.f32 0.0, %v687
        %689 = vdwg.mxu0
        %v691 = vsel %vm393, %v482, 0
        %v694 = vsel %vm393, %v483, 0
        %v697 = vsel %vm393, %v484, 0
        %v700 = vsel %vm393, %v485, 0
        %v703 = vsel %vm393, %v486, 0
        %v706 = vsel %vm393, %v487, 0
        %v709 = vsel %vm393, %v488, 0
        %v712 = vsel %vm393, %v489, 0
        %v715 = vsel %vm393, %v490, 0
        %v718 = vsel %vm393, %v491, 0
        %v721 = vsel %vm393, %v492, 0
        %v724 = vsel %vm393, %v493, 0
        %v727 = vsel %vm393, %v494, 0
        %v730 = vsel %vm393, %v495, 0
        %v733 = vsel %vm393, %v496, 0
        %v736 = vsel %vm393, %v497, 0
        %v739 = vsel %vm597, %v498, 0
        %741 = vmatpush.bf16.msra.mxu0 0
        %742 = vmatpush.bf16.msra.mxu0 0
        %743 = vmatpush.bf16.msra.mxu0 0
        %744 = vmatpush.bf16.msra.mxu0 0
        %745 = vmatpush.bf16.msra.mxu0 0
        %746 = vmatpush.bf16.msra.mxu0 0
        %747 = vmatpush.bf16.msra.mxu0 0
        %748 = vmatpush.bf16.msra.mxu0 %v739
        %749 = vmatmul.bf16.gmra.mxu0 %v691
        %v750 = vpop.f32.mrf.mxu0
        %v751 = vadd.f32 %v611, %v750
        %v752 = vpop.f32.mrf.mxu0
        %v753 = vadd.f32 %v613, %v752
        %754 = vmatmul.bf16.gmra.mxu0 %v694
        %v755 = vpop.f32.mrf.mxu0
        %v756 = vadd.f32 %v616, %v755
        %v757 = vpop.f32.mrf.mxu0
        %v758 = vadd.f32 %v618, %v757
        %759 = vmatmul.bf16.gmra.mxu0 %v697
        %v760 = vpop.f32.mrf.mxu0
        %v761 = vadd.f32 %v621, %v760
        %v762 = vpop.f32.mrf.mxu0
        %v763 = vadd.f32 %v623, %v762
        %764 = vmatmul.bf16.gmra.mxu0 %v700
        %v765 = vpop.f32.mrf.mxu0
        %v766 = vadd.f32 %v626, %v765
        %v767 = vpop.f32.mrf.mxu0
        %v768 = vadd.f32 %v628, %v767
        %769 = vmatmul.bf16.gmra.mxu0 %v703
        %v770 = vpop.f32.mrf.mxu0
        %v771 = vadd.f32 %v631, %v770
        %v772 = vpop.f32.mrf.mxu0
        %v773 = vadd.f32 %v633, %v772
        %774 = vmatmul.bf16.gmra.mxu0 %v706
        %v775 = vpop.f32.mrf.mxu0
        %v776 = vadd.f32 %v636, %v775
        %v777 = vpop.f32.mrf.mxu0
        %v778 = vadd.f32 %v638, %v777
        %779 = vmatmul.bf16.gmra.mxu0 %v709
        %v780 = vpop.f32.mrf.mxu0
        %v781 = vadd.f32 %v641, %v780
        %v782 = vpop.f32.mrf.mxu0
        %v783 = vadd.f32 %v643, %v782
        %784 = vmatmul.bf16.gmra.mxu0 %v712
        %v785 = vpop.f32.mrf.mxu0
        %v786 = vadd.f32 %v646, %v785
        %v787 = vpop.f32.mrf.mxu0
        %v788 = vadd.f32 %v648, %v787
        %789 = vmatmul.bf16.gmra.mxu0 %v715
        %v790 = vpop.f32.mrf.mxu0
        %v791 = vadd.f32 %v651, %v790
        %v792 = vpop.f32.mrf.mxu0
        %v793 = vadd.f32 %v653, %v792
        %794 = vmatmul.bf16.gmra.mxu0 %v718
        %v795 = vpop.f32.mrf.mxu0
        %v796 = vadd.f32 %v656, %v795
        %v797 = vpop.f32.mrf.mxu0
        %v798 = vadd.f32 %v658, %v797
        %799 = vmatmul.bf16.gmra.mxu0 %v721
        %v800 = vpop.f32.mrf.mxu0
        %v801 = vadd.f32 %v661, %v800
        %v802 = vpop.f32.mrf.mxu0
        %v803 = vadd.f32 %v663, %v802
        %804 = vmatmul.bf16.gmra.mxu0 %v724
        %v805 = vpop.f32.mrf.mxu0
        %v806 = vadd.f32 %v666, %v805
        %v807 = vpop.f32.mrf.mxu0
        %v808 = vadd.f32 %v668, %v807
        %809 = vmatmul.bf16.gmra.mxu0 %v727
        %v810 = vpop.f32.mrf.mxu0
        %v811 = vadd.f32 %v671, %v810
        %v812 = vpop.f32.mrf.mxu0
        %v813 = vadd.f32 %v673, %v812
        %814 = vmatmul.bf16.gmra.mxu0 %v730
        %v815 = vpop.f32.mrf.mxu0
        %v816 = vadd.f32 %v676, %v815
        %v817 = vpop.f32.mrf.mxu0
        %v818 = vadd.f32 %v678, %v817
        %819 = vmatmul.bf16.gmra.mxu0 %v733
        %v820 = vpop.f32.mrf.mxu0
        %v821 = vadd.f32 %v681, %v820
        %v822 = vpop.f32.mrf.mxu0
        %v823 = vadd.f32 %v683, %v822
        %824 = vmatmul.bf16.gmra.mxu0 %v736
        %v825 = vpop.f32.mrf.mxu0
        %v826 = vadd.f32 %v686, %v825
        %v827 = vpop.f32.mrf.mxu0
        %v828 = vadd.f32 %v688, %v827
        %829 = vdwg.mxu0
        %v830 = vld [vmem:[#allocation2 + $0x2] sm:$0xff]
        %v831 = vld [vmem:[#allocation2 + $0xa] sm:$0xff]
        %v832 = vld [vmem:[#allocation2 + $0x12] sm:$0xff]
        %v833 = vld [vmem:[#allocation2 + $0x1a] sm:$0xff]
        %v834 = vld [vmem:[#allocation2 + $0x22] sm:$0xff]
        %v835 = vld [vmem:[#allocation2 + $0x2a] sm:$0xff]
        %v836 = vld [vmem:[#allocation2 + $0x32] sm:$0xff]
        %v837 = vld [vmem:[#allocation2 + $0x3a] sm:$0xff]
        %v838 = vld [vmem:[#allocation2 + $0x42] sm:$0xff]
        %v839 = vld [vmem:[#allocation2 + $0x4a] sm:$0xff]
        %v840 = vld [vmem:[#allocation2 + $0x52] sm:$0xff]
        %v841 = vld [vmem:[#allocation2 + $0x5a] sm:$0xff]
        %v842 = vld [vmem:[#allocation2 + $0x62] sm:$0xff]
        %v843 = vld [vmem:[#allocation2 + $0x6a] sm:$0xff]
        %v844 = vld [vmem:[#allocation2 + $0x72] sm:$0xff]
        %v845 = vld [vmem:[#allocation2 + $0x7a] sm:$0xff]
        %v846 = vld [vmem:[#allocation2 + $0x82] sm:$0xff]
        %v847 = vld [vmem:[#allocation2 + $0x8a] sm:$0xff]
        %v848 = vld [vmem:[#allocation2 + $0x92] sm:$0xff]
        %v849 = vld [vmem:[#allocation2 + $0x9a] sm:$0xff]
        %v850 = vld [vmem:[#allocation2 + $0xa2] sm:$0xff]
        %v851 = vld [vmem:[#allocation2 + $0xaa] sm:$0xff]
        %v852 = vld [vmem:[#allocation2 + $0xb2] sm:$0xff]
        %v853 = vld [vmem:[#allocation2 + $0xba] sm:$0xff]
        %v854 = vld [vmem:[#allocation2 + $0xc2] sm:$0xff]
        %v855 = vld [vmem:[#allocation2 + $0xca] sm:$0xff]
        %v856 = vld [vmem:[#allocation2 + $0xd2] sm:$0xff]
        %v857 = vld [vmem:[#allocation2 + $0xda] sm:$0xff]
        %v858 = vld [vmem:[#allocation2 + $0xe2] sm:$0xff]
        %v859 = vld [vmem:[#allocation2 + $0xea] sm:$0xff]
        %v860 = vld [vmem:[#allocation2 + $0xf2] sm:$0xff]
        %v861 = vld [vmem:[#allocation2 + $0xfa] sm:$0xff]
        %v862 = vpack.c.bf16 %v831, %v830
        %v863 = vpack.c.bf16 %v833, %v832
        %v864 = vpack.c.bf16 %v835, %v834
        %v865 = vpack.c.bf16 %v837, %v836
        %v866 = vpack.c.bf16 %v839, %v838
        %v867 = vpack.c.bf16 %v841, %v840
        %v868 = vpack.c.bf16 %v843, %v842
        %v869 = vpack.c.bf16 %v845, %v844
        %v870 = vpack.c.bf16 %v847, %v846
        %v871 = vpack.c.bf16 %v849, %v848
        %v872 = vpack.c.bf16 %v851, %v850
        %v873 = vpack.c.bf16 %v853, %v852
        %v874 = vpack.c.bf16 %v855, %v854
        %v875 = vpack.c.bf16 %v857, %v856
        %v876 = vpack.c.bf16 %v859, %v858
        %v877 = vpack.c.bf16 %v861, %v860
        %s878 = scalar_lea.vmem %s320, 4
        %v879 = vld [vmem:[%s878] sm:$0x3]
        %v881 = vsel %vm393, %v862, 0
        %v884 = vsel %vm393, %v863, 0
        %v887 = vsel %vm393, %v864, 0
        %v890 = vsel %vm393, %v865, 0
        %v893 = vsel %vm393, %v866, 0
        %v896 = vsel %vm393, %v867, 0
        %v899 = vsel %vm393, %v868, 0
        %v902 = vsel %vm393, %v869, 0
        %v905 = vsel %vm393, %v870, 0
        %v908 = vsel %vm393, %v871, 0
        %v911 = vsel %vm393, %v872, 0
        %v914 = vsel %vm393, %v873, 0
        %v917 = vsel %vm393, %v874, 0
        %v920 = vsel %vm393, %v875, 0
        %v923 = vsel %vm393, %v876, 0
        %v926 = vsel %vm393, %v877, 0
        %v929 = vsel %vm597, %v879, 0
        %931 = vmatpush.bf16.msra.mxu0 0
        %932 = vmatpush.bf16.msra.mxu0 0
        %933 = vmatpush.bf16.msra.mxu0 0
        %934 = vmatpush.bf16.msra.mxu0 0
        %935 = vmatpush.bf16.msra.mxu0 0
        %936 = vmatpush.bf16.msra.mxu0 0
        %937 = vmatpush.bf16.msra.mxu0 0
        %938 = vmatpush.bf16.msra.mxu0 %v929
        %939 = vmatmul.bf16.gmra.mxu0 %v881
        %v940 = vpop.f32.mrf.mxu0
        %v941 = vadd.f32 0.0, %v940
        %v942 = vpop.f32.mrf.mxu0
        %v943 = vadd.f32 0.0, %v942
        %944 = vmatmul.bf16.gmra.mxu0 %v884
        %v945 = vpop.f32.mrf.mxu0
        %v946 = vadd.f32 0.0, %v945
        %v947 = vpop.f32.mrf.mxu0
        %v948 = vadd.f32 0.0, %v947
        %949 = vmatmul.bf16.gmra.mxu0 %v887
        %v950 = vpop.f32.mrf.mxu0
        %v951 = vadd.f32 0.0, %v950
        %v952 = vpop.f32.mrf.mxu0
        %v953 = vadd.f32 0.0, %v952
        %954 = vmatmul.bf16.gmra.mxu0 %v890
        %v955 = vpop.f32.mrf.mxu0
        %v956 = vadd.f32 0.0, %v955
        %v957 = vpop.f32.mrf.mxu0
        %v958 = vadd.f32 0.0, %v957
        %959 = vmatmul.bf16.gmra.mxu0 %v893
        %v960 = vpop.f32.mrf.mxu0
        %v961 = vadd.f32 0.0, %v960
        %v962 = vpop.f32.mrf.mxu0
        %v963 = vadd.f32 0.0, %v962
        %964 = vmatmul.bf16.gmra.mxu0 %v896
        %v965 = vpop.f32.mrf.mxu0
        %v966 = vadd.f32 0.0, %v965
        %v967 = vpop.f32.mrf.mxu0
        %v968 = vadd.f32 0.0, %v967
        %969 = vmatmul.bf16.gmra.mxu0 %v899
        %v970 = vpop.f32.mrf.mxu0
        %v971 = vadd.f32 0.0, %v970
        %v972 = vpop.f32.mrf.mxu0
        %v973 = vadd.f32 0.0, %v972
        %974 = vmatmul.bf16.gmra.mxu0 %v902
        %v975 = vpop.f32.mrf.mxu0
        %v976 = vadd.f32 0.0, %v975
        %v977 = vpop.f32.mrf.mxu0
        %v978 = vadd.f32 0.0, %v977
        %979 = vmatmul.bf16.gmra.mxu0 %v905
        %v980 = vpop.f32.mrf.mxu0
        %v981 = vadd.f32 0.0, %v980
        %v982 = vpop.f32.mrf.mxu0
        %v983 = vadd.f32 0.0, %v982
        %984 = vmatmul.bf16.gmra.mxu0 %v908
        %v985 = vpop.f32.mrf.mxu0
        %v986 = vadd.f32 0.0, %v985
        %v987 = vpop.f32.mrf.mxu0
        %v988 = vadd.f32 0.0, %v987
        %989 = vmatmul.bf16.gmra.mxu0 %v911
        %v990 = vpop.f32.mrf.mxu0
        %v991 = vadd.f32 0.0, %v990
        %v992 = vpop.f32.mrf.mxu0
        %v993 = vadd.f32 0.0, %v992
        %994 = vmatmul.bf16.gmra.mxu0 %v914
        %v995 = vpop.f32.mrf.mxu0
        %v996 = vadd.f32 0.0, %v995
        %v997 = vpop.f32.mrf.mxu0
        %v998 = vadd.f32 0.0, %v997
        %999 = vmatmul.bf16.gmra.mxu0 %v917
        %v1000 = vpop.f32.mrf.mxu0
        %v1001 = vadd.f32 0.0, %v1000
        %v1002 = vpop.f32.mrf.mxu0
        %v1003 = vadd.f32 0.0, %v1002
        %1004 = vmatmul.bf16.gmra.mxu0 %v920
        %v1005 = vpop.f32.mrf.mxu0
        %v1006 = vadd.f32 0.0, %v1005
        %v1007 = vpop.f32.mrf.mxu0
        %v1008 = vadd.f32 0.0, %v1007
        %1009 = vmatmul.bf16.gmra.mxu0 %v923
        %v1010 = vpop.f32.mrf.mxu0
        %v1011 = vadd.f32 0.0, %v1010
        %v1012 = vpop.f32.mrf.mxu0
        %v1013 = vadd.f32 0.0, %v1012
        %1014 = vmatmul.bf16.gmra.mxu0 %v926
        %v1015 = vpop.f32.mrf.mxu0
        %v1016 = vadd.f32 0.0, %v1015
        %v1017 = vpop.f32.mrf.mxu0
        %v1018 = vadd.f32 0.0, %v1017
        %1019 = vdwg.mxu0
        %v1020 = vadd.f32 %v751, %v941
        %v1021 = vadd.f32 %v753, %v943
        %v1022 = vadd.f32 %v756, %v946
        %v1023 = vadd.f32 %v758, %v948
        %v1024 = vadd.f32 %v761, %v951
        %v1025 = vadd.f32 %v763, %v953
        %v1026 = vadd.f32 %v766, %v956
        %v1027 = vadd.f32 %v768, %v958
        %v1028 = vadd.f32 %v771, %v961
        %v1029 = vadd.f32 %v773, %v963
        %v1030 = vadd.f32 %v776, %v966
        %v1031 = vadd.f32 %v778, %v968
        %v1032 = vadd.f32 %v781, %v971
        %v1033 = vadd.f32 %v783, %v973
        %v1034 = vadd.f32 %v786, %v976
        %v1035 = vadd.f32 %v788, %v978
        %v1036 = vadd.f32 %v791, %v981
        %v1037 = vadd.f32 %v793, %v983
        %v1038 = vadd.f32 %v796, %v986
        %v1039 = vadd.f32 %v798, %v988
        %v1040 = vadd.f32 %v801, %v991
        %v1041 = vadd.f32 %v803, %v993
        %v1042 = vadd.f32 %v806, %v996
        %v1043 = vadd.f32 %v808, %v998
        %v1044 = vadd.f32 %v811, %v1001
        %v1045 = vadd.f32 %v813, %v1003
        %v1046 = vadd.f32 %v816, %v1006
        %v1047 = vadd.f32 %v818, %v1008
        %v1048 = vadd.f32 %v821, %v1011
        %v1049 = vadd.f32 %v823, %v1013
        %v1050 = vadd.f32 %v826, %v1016
        %v1051 = vadd.f32 %v828, %v1018
        %v1052 = vld [vmem:[#allocation2 + $0x12] sm:$0xff]
        %v1053 = vld [vmem:[#allocation2 + $0x1a] sm:$0xff]
        %v1054 = vld [vmem:[#allocation2 + $0x22] sm:$0xff]
        %v1055 = vld [vmem:[#allocation2 + $0x2a] sm:$0xff]
        %v1056 = vld [vmem:[#allocation2 + $0x32] sm:$0xff]
        %v1057 = vld [vmem:[#allocation2 + $0x3a] sm:$0xff]
        %v1058 = vld [vmem:[#allocation2 + $0x42] sm:$0xff]
        %v1059 = vld [vmem:[#allocation2 + $0x4a] sm:$0xff]
        %v1060 = vld [vmem:[#allocation2 + $0x52] sm:$0xff]
        %v1061 = vld [vmem:[#allocation2 + $0x5a] sm:$0xff]
        %v1062 = vld [vmem:[#allocation2 + $0x62] sm:$0xff]
        %v1063 = vld [vmem:[#allocation2 + $0x6a] sm:$0xff]
        %v1064 = vld [vmem:[#allocation2 + $0x72] sm:$0xff]
        %v1065 = vld [vmem:[#allocation2 + $0x7a] sm:$0xff]
        %v1066 = vld [vmem:[#allocation2 + $0x82] sm:$0xff]
        %v1067 = vld [vmem:[#allocation2 + $0x8a] sm:$0xff]
        %v1068 = vld [vmem:[#allocation2 + $0x92] sm:$0xff]
        %v1069 = vld [vmem:[#allocation2 + $0x9a] sm:$0xff]
        %v1070 = vld [vmem:[#allocation2 + $0xa2] sm:$0xff]
        %v1071 = vld [vmem:[#allocation2 + $0xaa] sm:$0xff]
        %v1072 = vld [vmem:[#allocation2 + $0xb2] sm:$0xff]
        %v1073 = vld [vmem:[#allocation2 + $0xba] sm:$0xff]
        %v1074 = vld [vmem:[#allocation2 + $0xc2] sm:$0xff]
        %v1075 = vld [vmem:[#allocation2 + $0xca] sm:$0xff]
        %v1076 = vld [vmem:[#allocation2 + $0xd2] sm:$0xff]
        %v1077 = vld [vmem:[#allocation2 + $0xda] sm:$0xff]
        %v1078 = vld [vmem:[#allocation2 + $0xe2] sm:$0xff]
        %v1079 = vld [vmem:[#allocation2 + $0xea] sm:$0xff]
        %v1080 = vld [vmem:[#allocation2 + $0xf2] sm:$0xff]
        %v1081 = vld [vmem:[#allocation2 + $0xfa] sm:$0xff]
        %v1082 = vld [vmem:[#allocation2 + $0x102] sm:$0xff]
        %v1083 = vld [vmem:[#allocation2 + $0x10a] sm:$0xff]
        %v1084 = vpack.c.bf16 %v1053, %v1052
        %v1085 = vpack.c.bf16 %v1055, %v1054
        %v1086 = vpack.c.bf16 %v1057, %v1056
        %v1087 = vpack.c.bf16 %v1059, %v1058
        %v1088 = vpack.c.bf16 %v1061, %v1060
        %v1089 = vpack.c.bf16 %v1063, %v1062
        %v1090 = vpack.c.bf16 %v1065, %v1064
        %v1091 = vpack.c.bf16 %v1067, %v1066
        %v1092 = vpack.c.bf16 %v1069, %v1068
        %v1093 = vpack.c.bf16 %v1071, %v1070
        %v1094 = vpack.c.bf16 %v1073, %v1072
        %v1095 = vpack.c.bf16 %v1075, %v1074
        %v1096 = vpack.c.bf16 %v1077, %v1076
        %v1097 = vpack.c.bf16 %v1079, %v1078
        %v1098 = vpack.c.bf16 %v1081, %v1080
        %v1099 = vpack.c.bf16 %v1083, %v1082
        %s1100 = scalar_lea.vmem %s320, 6
        %v1101 = vld [vmem:[%s1100] sm:$0x3]
        %v1103 = vsel %vm393, %v1084, 0
        %v1106 = vsel %vm393, %v1085, 0
        %v1109 = vsel %vm393, %v1086, 0
        %v1112 = vsel %vm393, %v1087, 0
        %v1115 = vsel %vm393, %v1088, 0
        %v1118 = vsel %vm393, %v1089, 0
        %v1121 = vsel %vm393, %v1090, 0
        %v1124 = vsel %vm393, %v1091, 0
        %v1127 = vsel %vm393, %v1092, 0
        %v1130 = vsel %vm393, %v1093, 0
        %v1133 = vsel %vm393, %v1094, 0
        %v1136 = vsel %vm393, %v1095, 0
        %v1139 = vsel %vm393, %v1096, 0
        %v1142 = vsel %vm393, %v1097, 0
        %v1145 = vsel %vm393, %v1098, 0
        %v1148 = vsel %vm393, %v1099, 0
        %v1151 = vsel %vm597, %v1101, 0
        %1153 = vmatpush.bf16.msra.mxu0 0
        %1154 = vmatpush.bf16.msra.mxu0 0
        %1155 = vmatpush.bf16.msra.mxu0 0
        %1156 = vmatpush.bf16.msra.mxu0 0
        %1157 = vmatpush.bf16.msra.mxu0 0
        %1158 = vmatpush.bf16.msra.mxu0 0
        %1159 = vmatpush.bf16.msra.mxu0 0
        %1160 = vmatpush.bf16.msra.mxu0 %v1151
        %1161 = vmatmul.bf16.gmra.mxu0 %v1103
        %v1162 = vpop.f32.mrf.mxu0
        %v1163 = vadd.f32 0.0, %v1162
        %v1164 = vpop.f32.mrf.mxu0
        %v1165 = vadd.f32 0.0, %v1164
        %1166 = vmatmul.bf16.gmra.mxu0 %v1106
        %v1167 = vpop.f32.mrf.mxu0
        %v1168 = vadd.f32 0.0, %v1167
        %v1169 = vpop.f32.mrf.mxu0
        %v1170 = vadd.f32 0.0, %v1169
        %1171 = vmatmul.bf16.gmra.mxu0 %v1109
        %v1172 = vpop.f32.mrf.mxu0
        %v1173 = vadd.f32 0.0, %v1172
        %v1174 = vpop.f32.mrf.mxu0
        %v1175 = vadd.f32 0.0, %v1174
        %1176 = vmatmul.bf16.gmra.mxu0 %v1112
        %v1177 = vpop.f32.mrf.mxu0
        %v1178 = vadd.f32 0.0, %v1177
        %v1179 = vpop.f32.mrf.mxu0
        %v1180 = vadd.f32 0.0, %v1179
        %1181 = vmatmul.bf16.gmra.mxu0 %v1115
        %v1182 = vpop.f32.mrf.mxu0
        %v1183 = vadd.f32 0.0, %v1182
        %v1184 = vpop.f32.mrf.mxu0
        %v1185 = vadd.f32 0.0, %v1184
        %1186 = vmatmul.bf16.gmra.mxu0 %v1118
        %v1187 = vpop.f32.mrf.mxu0
        %v1188 = vadd.f32 0.0, %v1187
        %v1189 = vpop.f32.mrf.mxu0
        %v1190 = vadd.f32 0.0, %v1189
        %1191 = vmatmul.bf16.gmra.mxu0 %v1121
        %v1192 = vpop.f32.mrf.mxu0
        %v1193 = vadd.f32 0.0, %v1192
        %v1194 = vpop.f32.mrf.mxu0
        %v1195 = vadd.f32 0.0, %v1194
        %1196 = vmatmul.bf16.gmra.mxu0 %v1124
        %v1197 = vpop.f32.mrf.mxu0
        %v1198 = vadd.f32 0.0, %v1197
        %v1199 = vpop.f32.mrf.mxu0
        %v1200 = vadd.f32 0.0, %v1199
        %1201 = vmatmul.bf16.gmra.mxu0 %v1127
        %v1202 = vpop.f32.mrf.mxu0
        %v1203 = vadd.f32 0.0, %v1202
        %v1204 = vpop.f32.mrf.mxu0
        %v1205 = vadd.f32 0.0, %v1204
        %1206 = vmatmul.bf16.gmra.mxu0 %v1130
        %v1207 = vpop.f32.mrf.mxu0
        %v1208 = vadd.f32 0.0, %v1207
        %v1209 = vpop.f32.mrf.mxu0
        %v1210 = vadd.f32 0.0, %v1209
        %1211 = vmatmul.bf16.gmra.mxu0 %v1133
        %v1212 = vpop.f32.mrf.mxu0
        %v1213 = vadd.f32 0.0, %v1212
        %v1214 = vpop.f32.mrf.mxu0
        %v1215 = vadd.f32 0.0, %v1214
        %1216 = vmatmul.bf16.gmra.mxu0 %v1136
        %v1217 = vpop.f32.mrf.mxu0
        %v1218 = vadd.f32 0.0, %v1217
        %v1219 = vpop.f32.mrf.mxu0
        %v1220 = vadd.f32 0.0, %v1219
        %1221 = vmatmul.bf16.gmra.mxu0 %v1139
        %v1222 = vpop.f32.mrf.mxu0
        %v1223 = vadd.f32 0.0, %v1222
        %v1224 = vpop.f32.mrf.mxu0
        %v1225 = vadd.f32 0.0, %v1224
        %1226 = vmatmul.bf16.gmra.mxu0 %v1142
        %v1227 = vpop.f32.mrf.mxu0
        %v1228 = vadd.f32 0.0, %v1227
        %v1229 = vpop.f32.mrf.mxu0
        %v1230 = vadd.f32 0.0, %v1229
        %1231 = vmatmul.bf16.gmra.mxu0 %v1145
        %v1232 = vpop.f32.mrf.mxu0
        %v1233 = vadd.f32 0.0, %v1232
        %v1234 = vpop.f32.mrf.mxu0
        %v1235 = vadd.f32 0.0, %v1234
        %1236 = vmatmul.bf16.gmra.mxu0 %v1148
        %v1237 = vpop.f32.mrf.mxu0
        %v1238 = vadd.f32 0.0, %v1237
        %v1239 = vpop.f32.mrf.mxu0
        %v1240 = vadd.f32 0.0, %v1239
        %1241 = vdwg.mxu0
        %v1242 = vadd.f32 %v1020, %v1163
        %v1243 = vadd.f32 %v1021, %v1165
        %v1244 = vadd.f32 %v1022, %v1168
        %v1245 = vadd.f32 %v1023, %v1170
        %v1246 = vadd.f32 %v1024, %v1173
        %v1247 = vadd.f32 %v1025, %v1175
        %v1248 = vadd.f32 %v1026, %v1178
        %v1249 = vadd.f32 %v1027, %v1180
        %v1250 = vadd.f32 %v1028, %v1183
        %v1251 = vadd.f32 %v1029, %v1185
        %v1252 = vadd.f32 %v1030, %v1188
        %v1253 = vadd.f32 %v1031, %v1190
        %v1254 = vadd.f32 %v1032, %v1193
        %v1255 = vadd.f32 %v1033, %v1195
        %v1256 = vadd.f32 %v1034, %v1198
        %v1257 = vadd.f32 %v1035, %v1200
        %v1258 = vadd.f32 %v1036, %v1203
        %v1259 = vadd.f32 %v1037, %v1205
        %v1260 = vadd.f32 %v1038, %v1208
        %v1261 = vadd.f32 %v1039, %v1210
        %v1262 = vadd.f32 %v1040, %v1213
        %v1263 = vadd.f32 %v1041, %v1215
        %v1264 = vadd.f32 %v1042, %v1218
        %v1265 = vadd.f32 %v1043, %v1220
        %v1266 = vadd.f32 %v1044, %v1223
        %v1267 = vadd.f32 %v1045, %v1225
        %v1268 = vadd.f32 %v1046, %v1228
        %v1269 = vadd.f32 %v1047, %v1230
        %v1270 = vadd.f32 %v1048, %v1233
        %v1271 = vadd.f32 %v1049, %v1235
        %v1272 = vadd.f32 %v1050, %v1238
        %v1273 = vadd.f32 %v1051, %v1240
        %v1274 = vld [vmem:[#allocation2 + $0x13] sm:$0xff]
        %v1275 = vld [vmem:[#allocation2 + $0x1b] sm:$0xff]
        %v1276 = vld [vmem:[#allocation2 + $0x23] sm:$0xff]
        %v1277 = vld [vmem:[#allocation2 + $0x2b] sm:$0xff]
        %v1278 = vld [vmem:[#allocation2 + $0x33] sm:$0xff]
        %v1279 = vld [vmem:[#allocation2 + $0x3b] sm:$0xff]
        %v1280 = vld [vmem:[#allocation2 + $0x43] sm:$0xff]
        %v1281 = vld [vmem:[#allocation2 + $0x4b] sm:$0xff]
        %v1282 = vld [vmem:[#allocation2 + $0x53] sm:$0xff]
        %v1283 = vld [vmem:[#allocation2 + $0x5b] sm:$0xff]
        %v1284 = vld [vmem:[#allocation2 + $0x63] sm:$0xff]
        %v1285 = vld [vmem:[#allocation2 + $0x6b] sm:$0xff]
        %v1286 = vld [vmem:[#allocation2 + $0x73] sm:$0xff]
        %v1287 = vld [vmem:[#allocation2 + $0x7b] sm:$0xff]
        %v1288 = vld [vmem:[#allocation2 + $0x83] sm:$0xff]
        %v1289 = vld [vmem:[#allocation2 + $0x8b] sm:$0xff]
        %v1290 = vld [vmem:[#allocation2 + $0x93] sm:$0xff]
        %v1291 = vld [vmem:[#allocation2 + $0x9b] sm:$0xff]
        %v1292 = vld [vmem:[#allocation2 + $0xa3] sm:$0xff]
        %v1293 = vld [vmem:[#allocation2 + $0xab] sm:$0xff]
        %v1294 = vld [vmem:[#allocation2 + $0xb3] sm:$0xff]
        %v1295 = vld [vmem:[#allocation2 + $0xbb] sm:$0xff]
        %v1296 = vld [vmem:[#allocation2 + $0xc3] sm:$0xff]
        %v1297 = vld [vmem:[#allocation2 + $0xcb] sm:$0xff]
        %v1298 = vld [vmem:[#allocation2 + $0xd3] sm:$0xff]
        %v1299 = vld [vmem:[#allocation2 + $0xdb] sm:$0xff]
        %v1300 = vld [vmem:[#allocation2 + $0xe3] sm:$0xff]
        %v1301 = vld [vmem:[#allocation2 + $0xeb] sm:$0xff]
        %v1302 = vld [vmem:[#allocation2 + $0xf3] sm:$0xff]
        %v1303 = vld [vmem:[#allocation2 + $0xfb] sm:$0xff]
        %v1304 = vld [vmem:[#allocation2 + $0x103] sm:$0xff]
        %v1305 = vld [vmem:[#allocation2 + $0x10b] sm:$0xff]
        %v1306 = vpack.c.bf16 %v1275, %v1274
        %v1307 = vpack.c.bf16 %v1277, %v1276
        %v1308 = vpack.c.bf16 %v1279, %v1278
        %v1309 = vpack.c.bf16 %v1281, %v1280
        %v1310 = vpack.c.bf16 %v1283, %v1282
        %v1311 = vpack.c.bf16 %v1285, %v1284
        %v1312 = vpack.c.bf16 %v1287, %v1286
        %v1313 = vpack.c.bf16 %v1289, %v1288
        %v1314 = vpack.c.bf16 %v1291, %v1290
        %v1315 = vpack.c.bf16 %v1293, %v1292
        %v1316 = vpack.c.bf16 %v1295, %v1294
        %v1317 = vpack.c.bf16 %v1297, %v1296
        %v1318 = vpack.c.bf16 %v1299, %v1298
        %v1319 = vpack.c.bf16 %v1301, %v1300
        %v1320 = vpack.c.bf16 %v1303, %v1302
        %v1321 = vpack.c.bf16 %v1305, %v1304
        %s1322 = scalar_lea.vmem %s320, 8
        %v1323 = vld [vmem:[%s1322] sm:$0x3]
        %v1325 = vsel %vm393, %v1306, 0
        %v1328 = vsel %vm393, %v1307, 0
        %v1331 = vsel %vm393, %v1308, 0
        %v1334 = vsel %vm393, %v1309, 0
        %v1337 = vsel %vm393, %v1310, 0
        %v1340 = vsel %vm393, %v1311, 0
        %v1343 = vsel %vm393, %v1312, 0
        %v1346 = vsel %vm393, %v1313, 0
        %v1349 = vsel %vm393, %v1314, 0
        %v1352 = vsel %vm393, %v1315, 0
        %v1355 = vsel %vm393, %v1316, 0
        %v1358 = vsel %vm393, %v1317, 0
        %v1361 = vsel %vm393, %v1318, 0
        %v1364 = vsel %vm393, %v1319, 0
        %v1367 = vsel %vm393, %v1320, 0
        %v1370 = vsel %vm393, %v1321, 0
        %v1373 = vsel %vm597, %v1323, 0
        %1375 = vmatpush.bf16.msra.mxu0 0
        %1376 = vmatpush.bf16.msra.mxu0 0
        %1377 = vmatpush.bf16.msra.mxu0 0
        %1378 = vmatpush.bf16.msra.mxu0 0
        %1379 = vmatpush.bf16.msra.mxu0 0
        %1380 = vmatpush.bf16.msra.mxu0 0
        %1381 = vmatpush.bf16.msra.mxu0 0
        %1382 = vmatpush.bf16.msra.mxu0 %v1373
        %1383 = vmatmul.bf16.gmra.mxu0 %v1325
        %v1384 = vpop.f32.mrf.mxu0
        %v1385 = vadd.f32 0.0, %v1384
        %v1386 = vpop.f32.mrf.mxu0
        %v1387 = vadd.f32 0.0, %v1386
        %1388 = vmatmul.bf16.gmra.mxu0 %v1328
        %v1389 = vpop.f32.mrf.mxu0
        %v1390 = vadd.f32 0.0, %v1389
        %v1391 = vpop.f32.mrf.mxu0
        %v1392 = vadd.f32 0.0, %v1391
        %1393 = vmatmul.bf16.gmra.mxu0 %v1331
        %v1394 = vpop.f32.mrf.mxu0
        %v1395 = vadd.f32 0.0, %v1394
        %v1396 = vpop.f32.mrf.mxu0
        %v1397 = vadd.f32 0.0, %v1396
        %1398 = vmatmul.bf16.gmra.mxu0 %v1334
        %v1399 = vpop.f32.mrf.mxu0
        %v1400 = vadd.f32 0.0, %v1399
        %v1401 = vpop.f32.mrf.mxu0
        %v1402 = vadd.f32 0.0, %v1401
        %1403 = vmatmul.bf16.gmra.mxu0 %v1337
        %v1404 = vpop.f32.mrf.mxu0
        %v1405 = vadd.f32 0.0, %v1404
        %v1406 = vpop.f32.mrf.mxu0
        %v1407 = vadd.f32 0.0, %v1406
        %1408 = vmatmul.bf16.gmra.mxu0 %v1340
        %v1409 = vpop.f32.mrf.mxu0
        %v1410 = vadd.f32 0.0, %v1409
        %v1411 = vpop.f32.mrf.mxu0
        %v1412 = vadd.f32 0.0, %v1411
        %1413 = vmatmul.bf16.gmra.mxu0 %v1343
        %v1414 = vpop.f32.mrf.mxu0
        %v1415 = vadd.f32 0.0, %v1414
        %v1416 = vpop.f32.mrf.mxu0
        %v1417 = vadd.f32 0.0, %v1416
        %1418 = vmatmul.bf16.gmra.mxu0 %v1346
        %v1419 = vpop.f32.mrf.mxu0
        %v1420 = vadd.f32 0.0, %v1419
        %v1421 = vpop.f32.mrf.mxu0
        %v1422 = vadd.f32 0.0, %v1421
        %1423 = vmatmul.bf16.gmra.mxu0 %v1349
        %v1424 = vpop.f32.mrf.mxu0
        %v1425 = vadd.f32 0.0, %v1424
        %v1426 = vpop.f32.mrf.mxu0
        %v1427 = vadd.f32 0.0, %v1426
        %1428 = vmatmul.bf16.gmra.mxu0 %v1352
        %v1429 = vpop.f32.mrf.mxu0
        %v1430 = vadd.f32 0.0, %v1429
        %v1431 = vpop.f32.mrf.mxu0
        %v1432 = vadd.f32 0.0, %v1431
        %1433 = vmatmul.bf16.gmra.mxu0 %v1355
        %v1434 = vpop.f32.mrf.mxu0
        %v1435 = vadd.f32 0.0, %v1434
        %v1436 = vpop.f32.mrf.mxu0
        %v1437 = vadd.f32 0.0, %v1436
        %1438 = vmatmul.bf16.gmra.mxu0 %v1358
        %v1439 = vpop.f32.mrf.mxu0
        %v1440 = vadd.f32 0.0, %v1439
        %v1441 = vpop.f32.mrf.mxu0
        %v1442 = vadd.f32 0.0, %v1441
        %1443 = vmatmul.bf16.gmra.mxu0 %v1361
        %v1444 = vpop.f32.mrf.mxu0
        %v1445 = vadd.f32 0.0, %v1444
        %v1446 = vpop.f32.mrf.mxu0
        %v1447 = vadd.f32 0.0, %v1446
        %1448 = vmatmul.bf16.gmra.mxu0 %v1364
        %v1449 = vpop.f32.mrf.mxu0
        %v1450 = vadd.f32 0.0, %v1449
        %v1451 = vpop.f32.mrf.mxu0
        %v1452 = vadd.f32 0.0, %v1451
        %1453 = vmatmul.bf16.gmra.mxu0 %v1367
        %v1454 = vpop.f32.mrf.mxu0
        %v1455 = vadd.f32 0.0, %v1454
        %v1456 = vpop.f32.mrf.mxu0
        %v1457 = vadd.f32 0.0, %v1456
        %1458 = vmatmul.bf16.gmra.mxu0 %v1370
        %v1459 = vpop.f32.mrf.mxu0
        %v1460 = vadd.f32 0.0, %v1459
        %v1461 = vpop.f32.mrf.mxu0
        %v1462 = vadd.f32 0.0, %v1461
        %1463 = vdwg.mxu0
        %v1464 = vadd.f32 %v1242, %v1385
        %v1465 = vadd.f32 %v1243, %v1387
        %v1466 = vadd.f32 %v1244, %v1390
        %v1467 = vadd.f32 %v1245, %v1392
        %v1468 = vadd.f32 %v1246, %v1395
        %v1469 = vadd.f32 %v1247, %v1397
        %v1470 = vadd.f32 %v1248, %v1400
        %v1471 = vadd.f32 %v1249, %v1402
        %v1472 = vadd.f32 %v1250, %v1405
        %v1473 = vadd.f32 %v1251, %v1407
        %v1474 = vadd.f32 %v1252, %v1410
        %v1475 = vadd.f32 %v1253, %v1412
        %v1476 = vadd.f32 %v1254, %v1415
        %v1477 = vadd.f32 %v1255, %v1417
        %v1478 = vadd.f32 %v1256, %v1420
        %v1479 = vadd.f32 %v1257, %v1422
        %v1480 = vadd.f32 %v1258, %v1425
        %v1481 = vadd.f32 %v1259, %v1427
        %v1482 = vadd.f32 %v1260, %v1430
        %v1483 = vadd.f32 %v1261, %v1432
        %v1484 = vadd.f32 %v1262, %v1435
        %v1485 = vadd.f32 %v1263, %v1437
        %v1486 = vadd.f32 %v1264, %v1440
        %v1487 = vadd.f32 %v1265, %v1442
        %v1488 = vadd.f32 %v1266, %v1445
        %v1489 = vadd.f32 %v1267, %v1447
        %v1490 = vadd.f32 %v1268, %v1450
        %v1491 = vadd.f32 %v1269, %v1452
        %v1492 = vadd.f32 %v1270, %v1455
        %v1493 = vadd.f32 %v1271, %v1457
        %v1494 = vadd.f32 %v1272, %v1460
        %v1495 = vadd.f32 %v1273, %v1462
        %v1496 = vld [vmem:[#allocation2 + $0x14] sm:$0xff]
        %v1497 = vld [vmem:[#allocation2 + $0x1c] sm:$0xff]
        %v1498 = vld [vmem:[#allocation2 + $0x24] sm:$0xff]
        %v1499 = vld [vmem:[#allocation2 + $0x2c] sm:$0xff]
        %v1500 = vld [vmem:[#allocation2 + $0x34] sm:$0xff]
        %v1501 = vld [vmem:[#allocation2 + $0x3c] sm:$0xff]
        %v1502 = vld [vmem:[#allocation2 + $0x44] sm:$0xff]
        %v1503 = vld [vmem:[#allocation2 + $0x4c] sm:$0xff]
        %v1504 = vld [vmem:[#allocation2 + $0x54] sm:$0xff]
        %v1505 = vld [vmem:[#allocation2 + $0x5c] sm:$0xff]
        %v1506 = vld [vmem:[#allocation2 + $0x64] sm:$0xff]
        %v1507 = vld [vmem:[#allocation2 + $0x6c] sm:$0xff]
        %v1508 = vld [vmem:[#allocation2 + $0x74] sm:$0xff]
        %v1509 = vld [vmem:[#allocation2 + $0x7c] sm:$0xff]
        %v1510 = vld [vmem:[#allocation2 + $0x84] sm:$0xff]
        %v1511 = vld [vmem:[#allocation2 + $0x8c] sm:$0xff]
        %v1512 = vld [vmem:[#allocation2 + $0x94] sm:$0xff]
        %v1513 = vld [vmem:[#allocation2 + $0x9c] sm:$0xff]
        %v1514 = vld [vmem:[#allocation2 + $0xa4] sm:$0xff]
        %v1515 = vld [vmem:[#allocation2 + $0xac] sm:$0xff]
        %v1516 = vld [vmem:[#allocation2 + $0xb4] sm:$0xff]
        %v1517 = vld [vmem:[#allocation2 + $0xbc] sm:$0xff]
        %v1518 = vld [vmem:[#allocation2 + $0xc4] sm:$0xff]
        %v1519 = vld [vmem:[#allocation2 + $0xcc] sm:$0xff]
        %v1520 = vld [vmem:[#allocation2 + $0xd4] sm:$0xff]
        %v1521 = vld [vmem:[#allocation2 + $0xdc] sm:$0xff]
        %v1522 = vld [vmem:[#allocation2 + $0xe4] sm:$0xff]
        %v1523 = vld [vmem:[#allocation2 + $0xec] sm:$0xff]
        %v1524 = vld [vmem:[#allocation2 + $0xf4] sm:$0xff]
        %v1525 = vld [vmem:[#allocation2 + $0xfc] sm:$0xff]
        %v1526 = vld [vmem:[#allocation2 + $0x104] sm:$0xff]
        %v1527 = vld [vmem:[#allocation2 + $0x10c] sm:$0xff]
        %v1528 = vpack.c.bf16 %v1497, %v1496
        %v1529 = vpack.c.bf16 %v1499, %v1498
        %v1530 = vpack.c.bf16 %v1501, %v1500
        %v1531 = vpack.c.bf16 %v1503, %v1502
        %v1532 = vpack.c.bf16 %v1505, %v1504
        %v1533 = vpack.c.bf16 %v1507, %v1506
        %v1534 = vpack.c.bf16 %v1509, %v1508
        %v1535 = vpack.c.bf16 %v1511, %v1510
        %v1536 = vpack.c.bf16 %v1513, %v1512
        %v1537 = vpack.c.bf16 %v1515, %v1514
        %v1538 = vpack.c.bf16 %v1517, %v1516
        %v1539 = vpack.c.bf16 %v1519, %v1518
        %v1540 = vpack.c.bf16 %v1521, %v1520
        %v1541 = vpack.c.bf16 %v1523, %v1522
        %v1542 = vpack.c.bf16 %v1525, %v1524
        %v1543 = vpack.c.bf16 %v1527, %v1526
        %s1544 = scalar_lea.vmem %s320, 10
        %v1545 = vld [vmem:[%s1544] sm:$0x3]
        %v1547 = vsel %vm393, %v1528, 0
        %v1550 = vsel %vm393, %v1529, 0
        %v1553 = vsel %vm393, %v1530, 0
        %v1556 = vsel %vm393, %v1531, 0
        %v1559 = vsel %vm393, %v1532, 0
        %v1562 = vsel %vm393, %v1533, 0
        %v1565 = vsel %vm393, %v1534, 0
        %v1568 = vsel %vm393, %v1535, 0
        %v1571 = vsel %vm393, %v1536, 0
        %v1574 = vsel %vm393, %v1537, 0
        %v1577 = vsel %vm393, %v1538, 0
        %v1580 = vsel %vm393, %v1539, 0
        %v1583 = vsel %vm393, %v1540, 0
        %v1586 = vsel %vm393, %v1541, 0
        %v1589 = vsel %vm393, %v1542, 0
        %v1592 = vsel %vm393, %v1543, 0
        %v1595 = vsel %vm597, %v1545, 0
        %1597 = vmatpush.bf16.msra.mxu0 0
        %1598 = vmatpush.bf16.msra.mxu0 0
        %1599 = vmatpush.bf16.msra.mxu0 0
        %1600 = vmatpush.bf16.msra.mxu0 0
        %1601 = vmatpush.bf16.msra.mxu0 0
        %1602 = vmatpush.bf16.msra.mxu0 0
        %1603 = vmatpush.bf16.msra.mxu0 0
        %1604 = vmatpush.bf16.msra.mxu0 %v1595
        %1605 = vmatmul.bf16.gmra.mxu0 %v1547
        %v1606 = vpop.f32.mrf.mxu0
        %v1607 = vadd.f32 0.0, %v1606
        %v1608 = vpop.f32.mrf.mxu0
        %v1609 = vadd.f32 0.0, %v1608
        %1610 = vmatmul.bf16.gmra.mxu0 %v1550
        %v1611 = vpop.f32.mrf.mxu0
        %v1612 = vadd.f32 0.0, %v1611
        %v1613 = vpop.f32.mrf.mxu0
        %v1614 = vadd.f32 0.0, %v1613
        %1615 = vmatmul.bf16.gmra.mxu0 %v1553
        %v1616 = vpop.f32.mrf.mxu0
        %v1617 = vadd.f32 0.0, %v1616
        %v1618 = vpop.f32.mrf.mxu0
        %v1619 = vadd.f32 0.0, %v1618
        %1620 = vmatmul.bf16.gmra.mxu0 %v1556
        %v1621 = vpop.f32.mrf.mxu0
        %v1622 = vadd.f32 0.0, %v1621
        %v1623 = vpop.f32.mrf.mxu0
        %v1624 = vadd.f32 0.0, %v1623
        %1625 = vmatmul.bf16.gmra.mxu0 %v1559
        %v1626 = vpop.f32.mrf.mxu0
        %v1627 = vadd.f32 0.0, %v1626
        %v1628 = vpop.f32.mrf.mxu0
        %v1629 = vadd.f32 0.0, %v1628
        %1630 = vmatmul.bf16.gmra.mxu0 %v1562
        %v1631 = vpop.f32.mrf.mxu0
        %v1632 = vadd.f32 0.0, %v1631
        %v1633 = vpop.f32.mrf.mxu0
        %v1634 = vadd.f32 0.0, %v1633
        %1635 = vmatmul.bf16.gmra.mxu0 %v1565
        %v1636 = vpop.f32.mrf.mxu0
        %v1637 = vadd.f32 0.0, %v1636
        %v1638 = vpop.f32.mrf.mxu0
        %v1639 = vadd.f32 0.0, %v1638
        %1640 = vmatmul.bf16.gmra.mxu0 %v1568
        %v1641 = vpop.f32.mrf.mxu0
        %v1642 = vadd.f32 0.0, %v1641
        %v1643 = vpop.f32.mrf.mxu0
        %v1644 = vadd.f32 0.0, %v1643
        %1645 = vmatmul.bf16.gmra.mxu0 %v1571
        %v1646 = vpop.f32.mrf.mxu0
        %v1647 = vadd.f32 0.0, %v1646
        %v1648 = vpop.f32.mrf.mxu0
        %v1649 = vadd.f32 0.0, %v1648
        %1650 = vmatmul.bf16.gmra.mxu0 %v1574
        %v1651 = vpop.f32.mrf.mxu0
        %v1652 = vadd.f32 0.0, %v1651
        %v1653 = vpop.f32.mrf.mxu0
        %v1654 = vadd.f32 0.0, %v1653
        %1655 = vmatmul.bf16.gmra.mxu0 %v1577
        %v1656 = vpop.f32.mrf.mxu0
        %v1657 = vadd.f32 0.0, %v1656
        %v1658 = vpop.f32.mrf.mxu0
        %v1659 = vadd.f32 0.0, %v1658
        %1660 = vmatmul.bf16.gmra.mxu0 %v1580
        %v1661 = vpop.f32.mrf.mxu0
        %v1662 = vadd.f32 0.0, %v1661
        %v1663 = vpop.f32.mrf.mxu0
        %v1664 = vadd.f32 0.0, %v1663
        %1665 = vmatmul.bf16.gmra.mxu0 %v1583
        %v1666 = vpop.f32.mrf.mxu0
        %v1667 = vadd.f32 0.0, %v1666
        %v1668 = vpop.f32.mrf.mxu0
        %v1669 = vadd.f32 0.0, %v1668
        %1670 = vmatmul.bf16.gmra.mxu0 %v1586
        %v1671 = vpop.f32.mrf.mxu0
        %v1672 = vadd.f32 0.0, %v1671
        %v1673 = vpop.f32.mrf.mxu0
        %v1674 = vadd.f32 0.0, %v1673
        %1675 = vmatmul.bf16.gmra.mxu0 %v1589
        %v1676 = vpop.f32.mrf.mxu0
        %v1677 = vadd.f32 0.0, %v1676
        %v1678 = vpop.f32.mrf.mxu0
        %v1679 = vadd.f32 0.0, %v1678
        %1680 = vmatmul.bf16.gmra.mxu0 %v1592
        %v1681 = vpop.f32.mrf.mxu0
        %v1682 = vadd.f32 0.0, %v1681
        %v1683 = vpop.f32.mrf.mxu0
        %v1684 = vadd.f32 0.0, %v1683
        %1685 = vdwg.mxu0
        %v1686 = vadd.f32 %v1464, %v1607
        %v1687 = vadd.f32 %v1465, %v1609
        %v1688 = vadd.f32 %v1466, %v1612
        %v1689 = vadd.f32 %v1467, %v1614
        %v1690 = vadd.f32 %v1468, %v1617
        %v1691 = vadd.f32 %v1469, %v1619
        %v1692 = vadd.f32 %v1470, %v1622
        %v1693 = vadd.f32 %v1471, %v1624
        %v1694 = vadd.f32 %v1472, %v1627
        %v1695 = vadd.f32 %v1473, %v1629
        %v1696 = vadd.f32 %v1474, %v1632
        %v1697 = vadd.f32 %v1475, %v1634
        %v1698 = vadd.f32 %v1476, %v1637
        %v1699 = vadd.f32 %v1477, %v1639
        %v1700 = vadd.f32 %v1478, %v1642
        %v1701 = vadd.f32 %v1479, %v1644
        %v1702 = vadd.f32 %v1480, %v1647
        %v1703 = vadd.f32 %v1481, %v1649
        %v1704 = vadd.f32 %v1482, %v1652
        %v1705 = vadd.f32 %v1483, %v1654
        %v1706 = vadd.f32 %v1484, %v1657
        %v1707 = vadd.f32 %v1485, %v1659
        %v1708 = vadd.f32 %v1486, %v1662
        %v1709 = vadd.f32 %v1487, %v1664
        %v1710 = vadd.f32 %v1488, %v1667
        %v1711 = vadd.f32 %v1489, %v1669
        %v1712 = vadd.f32 %v1490, %v1672
        %v1713 = vadd.f32 %v1491, %v1674
        %v1714 = vadd.f32 %v1492, %v1677
        %v1715 = vadd.f32 %v1493, %v1679
        %v1716 = vadd.f32 %v1494, %v1682
        %v1717 = vadd.f32 %v1495, %v1684
        %v1718 = vld [vmem:[#allocation2 + $0x24] sm:$0xff]
        %v1719 = vld [vmem:[#allocation2 + $0x2c] sm:$0xff]
        %v1720 = vld [vmem:[#allocation2 + $0x34] sm:$0xff]
        %v1721 = vld [vmem:[#allocation2 + $0x3c] sm:$0xff]
        %v1722 = vld [vmem:[#allocation2 + $0x44] sm:$0xff]
        %v1723 = vld [vmem:[#allocation2 + $0x4c] sm:$0xff]
        %v1724 = vld [vmem:[#allocation2 + $0x54] sm:$0xff]
        %v1725 = vld [vmem:[#allocation2 + $0x5c] sm:$0xff]
        %v1726 = vld [vmem:[#allocation2 + $0x64] sm:$0xff]
        %v1727 = vld [vmem:[#allocation2 + $0x6c] sm:$0xff]
        %v1728 = vld [vmem:[#allocation2 + $0x74] sm:$0xff]
        %v1729 = vld [vmem:[#allocation2 + $0x7c] sm:$0xff]
        %v1730 = vld [vmem:[#allocation2 + $0x84] sm:$0xff]
        %v1731 = vld [vmem:[#allocation2 + $0x8c] sm:$0xff]
        %v1732 = vld [vmem:[#allocation2 + $0x94] sm:$0xff]
        %v1733 = vld [vmem:[#allocation2 + $0x9c] sm:$0xff]
        %v1734 = vld [vmem:[#allocation2 + $0xa4] sm:$0xff]
        %v1735 = vld [vmem:[#allocation2 + $0xac] sm:$0xff]
        %v1736 = vld [vmem:[#allocation2 + $0xb4] sm:$0xff]
        %v1737 = vld [vmem:[#allocation2 + $0xbc] sm:$0xff]
        %v1738 = vld [vmem:[#allocation2 + $0xc4] sm:$0xff]
        %v1739 = vld [vmem:[#allocation2 + $0xcc] sm:$0xff]
        %v1740 = vld [vmem:[#allocation2 + $0xd4] sm:$0xff]
        %v1741 = vld [vmem:[#allocation2 + $0xdc] sm:$0xff]
        %v1742 = vld [vmem:[#allocation2 + $0xe4] sm:$0xff]
        %v1743 = vld [vmem:[#allocation2 + $0xec] sm:$0xff]
        %v1744 = vld [vmem:[#allocation2 + $0xf4] sm:$0xff]
        %v1745 = vld [vmem:[#allocation2 + $0xfc] sm:$0xff]
        %v1746 = vld [vmem:[#allocation2 + $0x104] sm:$0xff]
        %v1747 = vld [vmem:[#allocation2 + $0x10c] sm:$0xff]
        %v1748 = vld [vmem:[#allocation2 + $0x114] sm:$0xff]
        %v1749 = vld [vmem:[#allocation2 + $0x11c] sm:$0xff]
        %v1750 = vpack.c.bf16 %v1719, %v1718
        %v1751 = vpack.c.bf16 %v1721, %v1720
        %v1752 = vpack.c.bf16 %v1723, %v1722
        %v1753 = vpack.c.bf16 %v1725, %v1724
        %v1754 = vpack.c.bf16 %v1727, %v1726
        %v1755 = vpack.c.bf16 %v1729, %v1728
        %v1756 = vpack.c.bf16 %v1731, %v1730
        %v1757 = vpack.c.bf16 %v1733, %v1732
        %v1758 = vpack.c.bf16 %v1735, %v1734
        %v1759 = vpack.c.bf16 %v1737, %v1736
        %v1760 = vpack.c.bf16 %v1739, %v1738
        %v1761 = vpack.c.bf16 %v1741, %v1740
        %v1762 = vpack.c.bf16 %v1743, %v1742
        %v1763 = vpack.c.bf16 %v1745, %v1744
        %v1764 = vpack.c.bf16 %v1747, %v1746
        %v1765 = vpack.c.bf16 %v1749, %v1748
        %s1766 = scalar_lea.vmem %s320, 12
        %v1767 = vld [vmem:[%s1766] sm:$0x3]
        %v1769 = vsel %vm393, %v1750, 0
        %v1772 = vsel %vm393, %v1751, 0
        %v1775 = vsel %vm393, %v1752, 0
        %v1778 = vsel %vm393, %v1753, 0
        %v1781 = vsel %vm393, %v1754, 0
        %v1784 = vsel %vm393, %v1755, 0
        %v1787 = vsel %vm393, %v1756, 0
        %v1790 = vsel %vm393, %v1757, 0
        %v1793 = vsel %vm393, %v1758, 0
        %v1796 = vsel %vm393, %v1759, 0
        %v1799 = vsel %vm393, %v1760, 0
        %v1802 = vsel %vm393, %v1761, 0
        %v1805 = vsel %vm393, %v1762, 0
        %v1808 = vsel %vm393, %v1763, 0
        %v1811 = vsel %vm393, %v1764, 0
        %v1814 = vsel %vm393, %v1765, 0
        %v1817 = vsel %vm597, %v1767, 0
        %1819 = vmatpush.bf16.msra.mxu0 0
        %1820 = vmatpush.bf16.msra.mxu0 0
        %1821 = vmatpush.bf16.msra.mxu0 0
        %1822 = vmatpush.bf16.msra.mxu0 0
        %1823 = vmatpush.bf16.msra.mxu0 0
        %1824 = vmatpush.bf16.msra.mxu0 0
        %1825 = vmatpush.bf16.msra.mxu0 0
        %1826 = vmatpush.bf16.msra.mxu0 %v1817
        %1827 = vmatmul.bf16.gmra.mxu0 %v1769
        %v1828 = vpop.f32.mrf.mxu0
        %v1829 = vadd.f32 0.0, %v1828
        %v1830 = vpop.f32.mrf.mxu0
        %v1831 = vadd.f32 0.0, %v1830
        %1832 = vmatmul.bf16.gmra.mxu0 %v1772
        %v1833 = vpop.f32.mrf.mxu0
        %v1834 = vadd.f32 0.0, %v1833
        %v1835 = vpop.f32.mrf.mxu0
        %v1836 = vadd.f32 0.0, %v1835
        %1837 = vmatmul.bf16.gmra.mxu0 %v1775
        %v1838 = vpop.f32.mrf.mxu0
        %v1839 = vadd.f32 0.0, %v1838
        %v1840 = vpop.f32.mrf.mxu0
        %v1841 = vadd.f32 0.0, %v1840
        %1842 = vmatmul.bf16.gmra.mxu0 %v1778
        %v1843 = vpop.f32.mrf.mxu0
        %v1844 = vadd.f32 0.0, %v1843
        %v1845 = vpop.f32.mrf.mxu0
        %v1846 = vadd.f32 0.0, %v1845
        %1847 = vmatmul.bf16.gmra.mxu0 %v1781
        %v1848 = vpop.f32.mrf.mxu0
        %v1849 = vadd.f32 0.0, %v1848
        %v1850 = vpop.f32.mrf.mxu0
        %v1851 = vadd.f32 0.0, %v1850
        %1852 = vmatmul.bf16.gmra.mxu0 %v1784
        %v1853 = vpop.f32.mrf.mxu0
        %v1854 = vadd.f32 0.0, %v1853
        %v1855 = vpop.f32.mrf.mxu0
        %v1856 = vadd.f32 0.0, %v1855
        %1857 = vmatmul.bf16.gmra.mxu0 %v1787
        %v1858 = vpop.f32.mrf.mxu0
        %v1859 = vadd.f32 0.0, %v1858
        %v1860 = vpop.f32.mrf.mxu0
        %v1861 = vadd.f32 0.0, %v1860
        %1862 = vmatmul.bf16.gmra.mxu0 %v1790
        %v1863 = vpop.f32.mrf.mxu0
        %v1864 = vadd.f32 0.0, %v1863
        %v1865 = vpop.f32.mrf.mxu0
        %v1866 = vadd.f32 0.0, %v1865
        %1867 = vmatmul.bf16.gmra.mxu0 %v1793
        %v1868 = vpop.f32.mrf.mxu0
        %v1869 = vadd.f32 0.0, %v1868
        %v1870 = vpop.f32.mrf.mxu0
        %v1871 = vadd.f32 0.0, %v1870
        %1872 = vmatmul.bf16.gmra.mxu0 %v1796
        %v1873 = vpop.f32.mrf.mxu0
        %v1874 = vadd.f32 0.0, %v1873
        %v1875 = vpop.f32.mrf.mxu0
        %v1876 = vadd.f32 0.0, %v1875
        %1877 = vmatmul.bf16.gmra.mxu0 %v1799
        %v1878 = vpop.f32.mrf.mxu0
        %v1879 = vadd.f32 0.0, %v1878
        %v1880 = vpop.f32.mrf.mxu0
        %v1881 = vadd.f32 0.0, %v1880
        %1882 = vmatmul.bf16.gmra.mxu0 %v1802
        %v1883 = vpop.f32.mrf.mxu0
        %v1884 = vadd.f32 0.0, %v1883
        %v1885 = vpop.f32.mrf.mxu0
        %v1886 = vadd.f32 0.0, %v1885
        %1887 = vmatmul.bf16.gmra.mxu0 %v1805
        %v1888 = vpop.f32.mrf.mxu0
        %v1889 = vadd.f32 0.0, %v1888
        %v1890 = vpop.f32.mrf.mxu0
        %v1891 = vadd.f32 0.0, %v1890
        %1892 = vmatmul.bf16.gmra.mxu0 %v1808
        %v1893 = vpop.f32.mrf.mxu0
        %v1894 = vadd.f32 0.0, %v1893
        %v1895 = vpop.f32.mrf.mxu0
        %v1896 = vadd.f32 0.0, %v1895
        %1897 = vmatmul.bf16.gmra.mxu0 %v1811
        %v1898 = vpop.f32.mrf.mxu0
        %v1899 = vadd.f32 0.0, %v1898
        %v1900 = vpop.f32.mrf.mxu0
        %v1901 = vadd.f32 0.0, %v1900
        %1902 = vmatmul.bf16.gmra.mxu0 %v1814
        %v1903 = vpop.f32.mrf.mxu0
        %v1904 = vadd.f32 0.0, %v1903
        %v1905 = vpop.f32.mrf.mxu0
        %v1906 = vadd.f32 0.0, %v1905
        %1907 = vdwg.mxu0
        %v1908 = vadd.f32 %v1686, %v1829
        %v1909 = vadd.f32 %v1687, %v1831
        %v1910 = vadd.f32 %v1688, %v1834
        %v1911 = vadd.f32 %v1689, %v1836
        %v1912 = vadd.f32 %v1690, %v1839
        %v1913 = vadd.f32 %v1691, %v1841
        %v1914 = vadd.f32 %v1692, %v1844
        %v1915 = vadd.f32 %v1693, %v1846
        %v1916 = vadd.f32 %v1694, %v1849
        %v1917 = vadd.f32 %v1695, %v1851
        %v1918 = vadd.f32 %v1696, %v1854
        %v1919 = vadd.f32 %v1697, %v1856
        %v1920 = vadd.f32 %v1698, %v1859
        %v1921 = vadd.f32 %v1699, %v1861
        %v1922 = vadd.f32 %v1700, %v1864
        %v1923 = vadd.f32 %v1701, %v1866
        %v1924 = vadd.f32 %v1702, %v1869
        %v1925 = vadd.f32 %v1703, %v1871
        %v1926 = vadd.f32 %v1704, %v1874
        %v1927 = vadd.f32 %v1705, %v1876
        %v1928 = vadd.f32 %v1706, %v1879
        %v1929 = vadd.f32 %v1707, %v1881
        %v1930 = vadd.f32 %v1708, %v1884
        %v1931 = vadd.f32 %v1709, %v1886
        %v1932 = vadd.f32 %v1710, %v1889
        %v1933 = vadd.f32 %v1711, %v1891
        %v1934 = vadd.f32 %v1712, %v1894
        %v1935 = vadd.f32 %v1713, %v1896
        %v1936 = vadd.f32 %v1714, %v1899
        %v1937 = vadd.f32 %v1715, %v1901
        %v1938 = vadd.f32 %v1716, %v1904
        %v1939 = vadd.f32 %v1717, %v1906
        %v1940 = vld [vmem:[#allocation2 + $0x25] sm:$0xff]
        %v1941 = vld [vmem:[#allocation2 + $0x2d] sm:$0xff]
        %v1942 = vld [vmem:[#allocation2 + $0x35] sm:$0xff]
        %v1943 = vld [vmem:[#allocation2 + $0x3d] sm:$0xff]
        %v1944 = vld [vmem:[#allocation2 + $0x45] sm:$0xff]
        %v1945 = vld [vmem:[#allocation2 + $0x4d] sm:$0xff]
        %v1946 = vld [vmem:[#allocation2 + $0x55] sm:$0xff]
        %v1947 = vld [vmem:[#allocation2 + $0x5d] sm:$0xff]
        %v1948 = vld [vmem:[#allocation2 + $0x65] sm:$0xff]
        %v1949 = vld [vmem:[#allocation2 + $0x6d] sm:$0xff]
        %v1950 = vld [vmem:[#allocation2 + $0x75] sm:$0xff]
        %v1951 = vld [vmem:[#allocation2 + $0x7d] sm:$0xff]
        %v1952 = vld [vmem:[#allocation2 + $0x85] sm:$0xff]
        %v1953 = vld [vmem:[#allocation2 + $0x8d] sm:$0xff]
        %v1954 = vld [vmem:[#allocation2 + $0x95] sm:$0xff]
        %v1955 = vld [vmem:[#allocation2 + $0x9d] sm:$0xff]
        %v1956 = vld [vmem:[#allocation2 + $0xa5] sm:$0xff]
        %v1957 = vld [vmem:[#allocation2 + $0xad] sm:$0xff]
        %v1958 = vld [vmem:[#allocation2 + $0xb5] sm:$0xff]
        %v1959 = vld [vmem:[#allocation2 + $0xbd] sm:$0xff]
        %v1960 = vld [vmem:[#allocation2 + $0xc5] sm:$0xff]
        %v1961 = vld [vmem:[#allocation2 + $0xcd] sm:$0xff]
        %v1962 = vld [vmem:[#allocation2 + $0xd5] sm:$0xff]
        %v1963 = vld [vmem:[#allocation2 + $0xdd] sm:$0xff]
        %v1964 = vld [vmem:[#allocation2 + $0xe5] sm:$0xff]
        %v1965 = vld [vmem:[#allocation2 + $0xed] sm:$0xff]
        %v1966 = vld [vmem:[#allocation2 + $0xf5] sm:$0xff]
        %v1967 = vld [vmem:[#allocation2 + $0xfd] sm:$0xff]
        %v1968 = vld [vmem:[#allocation2 + $0x105] sm:$0xff]
        %v1969 = vld [vmem:[#allocation2 + $0x10d] sm:$0xff]
        %v1970 = vld [vmem:[#allocation2 + $0x115] sm:$0xff]
        %v1971 = vld [vmem:[#allocation2 + $0x11d] sm:$0xff]
        %v1972 = vpack.c.bf16 %v1941, %v1940
        %v1973 = vpack.c.bf16 %v1943, %v1942
        %v1974 = vpack.c.bf16 %v1945, %v1944
        %v1975 = vpack.c.bf16 %v1947, %v1946
        %v1976 = vpack.c.bf16 %v1949, %v1948
        %v1977 = vpack.c.bf16 %v1951, %v1950
        %v1978 = vpack.c.bf16 %v1953, %v1952
        %v1979 = vpack.c.bf16 %v1955, %v1954
        %v1980 = vpack.c.bf16 %v1957, %v1956
        %v1981 = vpack.c.bf16 %v1959, %v1958
        %v1982 = vpack.c.bf16 %v1961, %v1960
        %v1983 = vpack.c.bf16 %v1963, %v1962
        %v1984 = vpack.c.bf16 %v1965, %v1964
        %v1985 = vpack.c.bf16 %v1967, %v1966
        %v1986 = vpack.c.bf16 %v1969, %v1968
        %v1987 = vpack.c.bf16 %v1971, %v1970
        %s1988 = scalar_lea.vmem %s320, 14
        %v1989 = vld [vmem:[%s1988] sm:$0x3]
        %v1991 = vsel %vm393, %v1972, 0
        %v1994 = vsel %vm393, %v1973, 0
        %v1997 = vsel %vm393, %v1974, 0
        %v2000 = vsel %vm393, %v1975, 0
        %v2003 = vsel %vm393, %v1976, 0
        %v2006 = vsel %vm393, %v1977, 0
        %v2009 = vsel %vm393, %v1978, 0
        %v2012 = vsel %vm393, %v1979, 0
        %v2015 = vsel %vm393, %v1980, 0
        %v2018 = vsel %vm393, %v1981, 0
        %v2021 = vsel %vm393, %v1982, 0
        %v2024 = vsel %vm393, %v1983, 0
        %v2027 = vsel %vm393, %v1984, 0
        %v2030 = vsel %vm393, %v1985, 0
        %v2033 = vsel %vm393, %v1986, 0
        %v2036 = vsel %vm393, %v1987, 0
        %v2039 = vsel %vm597, %v1989, 0
        %2041 = vmatpush.bf16.msra.mxu0 0
        %2042 = vmatpush.bf16.msra.mxu0 0
        %2043 = vmatpush.bf16.msra.mxu0 0
        %2044 = vmatpush.bf16.msra.mxu0 0
        %2045 = vmatpush.bf16.msra.mxu0 0
        %2046 = vmatpush.bf16.msra.mxu0 0
        %2047 = vmatpush.bf16.msra.mxu0 0
        %2048 = vmatpush.bf16.msra.mxu0 %v2039
        %2049 = vmatmul.bf16.gmra.mxu0 %v1991
        %v2050 = vpop.f32.mrf.mxu0
        %v2051 = vadd.f32 0.0, %v2050
        %v2052 = vpop.f32.mrf.mxu0
        %v2053 = vadd.f32 0.0, %v2052
        %2054 = vmatmul.bf16.gmra.mxu0 %v1994
        %v2055 = vpop.f32.mrf.mxu0
        %v2056 = vadd.f32 0.0, %v2055
        %v2057 = vpop.f32.mrf.mxu0
        %v2058 = vadd.f32 0.0, %v2057
        %2059 = vmatmul.bf16.gmra.mxu0 %v1997
        %v2060 = vpop.f32.mrf.mxu0
        %v2061 = vadd.f32 0.0, %v2060
        %v2062 = vpop.f32.mrf.mxu0
        %v2063 = vadd.f32 0.0, %v2062
        %2064 = vmatmul.bf16.gmra.mxu0 %v2000
        %v2065 = vpop.f32.mrf.mxu0
        %v2066 = vadd.f32 0.0, %v2065
        %v2067 = vpop.f32.mrf.mxu0
        %v2068 = vadd.f32 0.0, %v2067
        %2069 = vmatmul.bf16.gmra.mxu0 %v2003
        %v2070 = vpop.f32.mrf.mxu0
        %v2071 = vadd.f32 0.0, %v2070
        %v2072 = vpop.f32.mrf.mxu0
        %v2073 = vadd.f32 0.0, %v2072
        %2074 = vmatmul.bf16.gmra.mxu0 %v2006
        %v2075 = vpop.f32.mrf.mxu0
        %v2076 = vadd.f32 0.0, %v2075
        %v2077 = vpop.f32.mrf.mxu0
        %v2078 = vadd.f32 0.0, %v2077
        %2079 = vmatmul.bf16.gmra.mxu0 %v2009
        %v2080 = vpop.f32.mrf.mxu0
        %v2081 = vadd.f32 0.0, %v2080
        %v2082 = vpop.f32.mrf.mxu0
        %v2083 = vadd.f32 0.0, %v2082
        %2084 = vmatmul.bf16.gmra.mxu0 %v2012
        %v2085 = vpop.f32.mrf.mxu0
        %v2086 = vadd.f32 0.0, %v2085
        %v2087 = vpop.f32.mrf.mxu0
        %v2088 = vadd.f32 0.0, %v2087
        %2089 = vmatmul.bf16.gmra.mxu0 %v2015
        %v2090 = vpop.f32.mrf.mxu0
        %v2091 = vadd.f32 0.0, %v2090
        %v2092 = vpop.f32.mrf.mxu0
        %v2093 = vadd.f32 0.0, %v2092
        %2094 = vmatmul.bf16.gmra.mxu0 %v2018
        %v2095 = vpop.f32.mrf.mxu0
        %v2096 = vadd.f32 0.0, %v2095
        %v2097 = vpop.f32.mrf.mxu0
        %v2098 = vadd.f32 0.0, %v2097
        %2099 = vmatmul.bf16.gmra.mxu0 %v2021
        %v2100 = vpop.f32.mrf.mxu0
        %v2101 = vadd.f32 0.0, %v2100
        %v2102 = vpop.f32.mrf.mxu0
        %v2103 = vadd.f32 0.0, %v2102
        %2104 = vmatmul.bf16.gmra.mxu0 %v2024
        %v2105 = vpop.f32.mrf.mxu0
        %v2106 = vadd.f32 0.0, %v2105
        %v2107 = vpop.f32.mrf.mxu0
        %v2108 = vadd.f32 0.0, %v2107
        %2109 = vmatmul.bf16.gmra.mxu0 %v2027
        %v2110 = vpop.f32.mrf.mxu0
        %v2111 = vadd.f32 0.0, %v2110
        %v2112 = vpop.f32.mrf.mxu0
        %v2113 = vadd.f32 0.0, %v2112
        %2114 = vmatmul.bf16.gmra.mxu0 %v2030
        %v2115 = vpop.f32.mrf.mxu0
        %v2116 = vadd.f32 0.0, %v2115
        %v2117 = vpop.f32.mrf.mxu0
        %v2118 = vadd.f32 0.0, %v2117
        %2119 = vmatmul.bf16.gmra.mxu0 %v2033
        %v2120 = vpop.f32.mrf.mxu0
        %v2121 = vadd.f32 0.0, %v2120
        %v2122 = vpop.f32.mrf.mxu0
        %v2123 = vadd.f32 0.0, %v2122
        %2124 = vmatmul.bf16.gmra.mxu0 %v2036
        %v2125 = vpop.f32.mrf.mxu0
        %v2126 = vadd.f32 0.0, %v2125
        %v2127 = vpop.f32.mrf.mxu0
        %v2128 = vadd.f32 0.0, %v2127
        %2129 = vdwg.mxu0
        %v2130 = vadd.f32 %v1908, %v2051
        %v2131 = vadd.f32 %v1909, %v2053
        %v2132 = vadd.f32 %v1910, %v2056
        %v2133 = vadd.f32 %v1911, %v2058
        %v2134 = vadd.f32 %v1912, %v2061
        %v2135 = vadd.f32 %v1913, %v2063
        %v2136 = vadd.f32 %v1914, %v2066
        %v2137 = vadd.f32 %v1915, %v2068
        %v2138 = vadd.f32 %v1916, %v2071
        %v2139 = vadd.f32 %v1917, %v2073
        %v2140 = vadd.f32 %v1918, %v2076
        %v2141 = vadd.f32 %v1919, %v2078
        %v2142 = vadd.f32 %v1920, %v2081
        %v2143 = vadd.f32 %v1921, %v2083
        %v2144 = vadd.f32 %v1922, %v2086
        %v2145 = vadd.f32 %v1923, %v2088
        %v2146 = vadd.f32 %v1924, %v2091
        %v2147 = vadd.f32 %v1925, %v2093
        %v2148 = vadd.f32 %v1926, %v2096
        %v2149 = vadd.f32 %v1927, %v2098
        %v2150 = vadd.f32 %v1928, %v2101
        %v2151 = vadd.f32 %v1929, %v2103
        %v2152 = vadd.f32 %v1930, %v2106
        %v2153 = vadd.f32 %v1931, %v2108
        %v2154 = vadd.f32 %v1932, %v2111
        %v2155 = vadd.f32 %v1933, %v2113
        %v2156 = vadd.f32 %v1934, %v2116
        %v2157 = vadd.f32 %v1935, %v2118
        %v2158 = vadd.f32 %v1936, %v2121
        %v2159 = vadd.f32 %v1937, %v2123
        %v2160 = vadd.f32 %v1938, %v2126
        %v2161 = vadd.f32 %v1939, %v2128
        %v2162 = vld [vmem:[#allocation2 + $0x26] sm:$0xff]
        %v2163 = vld [vmem:[#allocation2 + $0x2e] sm:$0xff]
        %v2164 = vld [vmem:[#allocation2 + $0x36] sm:$0xff]
        %v2165 = vld [vmem:[#allocation2 + $0x3e] sm:$0xff]
        %v2166 = vld [vmem:[#allocation2 + $0x46] sm:$0xff]
        %v2167 = vld [vmem:[#allocation2 + $0x4e] sm:$0xff]
        %v2168 = vld [vmem:[#allocation2 + $0x56] sm:$0xff]
        %v2169 = vld [vmem:[#allocation2 + $0x5e] sm:$0xff]
        %v2170 = vld [vmem:[#allocation2 + $0x66] sm:$0xff]
        %v2171 = vld [vmem:[#allocation2 + $0x6e] sm:$0xff]
        %v2172 = vld [vmem:[#allocation2 + $0x76] sm:$0xff]
        %v2173 = vld [vmem:[#allocation2 + $0x7e] sm:$0xff]
        %v2174 = vld [vmem:[#allocation2 + $0x86] sm:$0xff]
        %v2175 = vld [vmem:[#allocation2 + $0x8e] sm:$0xff]
        %v2176 = vld [vmem:[#allocation2 + $0x96] sm:$0xff]
        %v2177 = vld [vmem:[#allocation2 + $0x9e] sm:$0xff]
        %v2178 = vld [vmem:[#allocation2 + $0xa6] sm:$0xff]
        %v2179 = vld [vmem:[#allocation2 + $0xae] sm:$0xff]
        %v2180 = vld [vmem:[#allocation2 + $0xb6] sm:$0xff]
        %v2181 = vld [vmem:[#allocation2 + $0xbe] sm:$0xff]
        %v2182 = vld [vmem:[#allocation2 + $0xc6] sm:$0xff]
        %v2183 = vld [vmem:[#allocation2 + $0xce] sm:$0xff]
        %v2184 = vld [vmem:[#allocation2 + $0xd6] sm:$0xff]
        %v2185 = vld [vmem:[#allocation2 + $0xde] sm:$0xff]
        %v2186 = vld [vmem:[#allocation2 + $0xe6] sm:$0xff]
        %v2187 = vld [vmem:[#allocation2 + $0xee] sm:$0xff]
        %v2188 = vld [vmem:[#allocation2 + $0xf6] sm:$0xff]
        %v2189 = vld [vmem:[#allocation2 + $0xfe] sm:$0xff]
        %v2190 = vld [vmem:[#allocation2 + $0x106] sm:$0xff]
        %v2191 = vld [vmem:[#allocation2 + $0x10e] sm:$0xff]
        %v2192 = vld [vmem:[#allocation2 + $0x116] sm:$0xff]
        %v2193 = vld [vmem:[#allocation2 + $0x11e] sm:$0xff]
        %v2194 = vpack.c.bf16 %v2163, %v2162
        %v2195 = vpack.c.bf16 %v2165, %v2164
        %v2196 = vpack.c.bf16 %v2167, %v2166
        %v2197 = vpack.c.bf16 %v2169, %v2168
        %v2198 = vpack.c.bf16 %v2171, %v2170
        %v2199 = vpack.c.bf16 %v2173, %v2172
        %v2200 = vpack.c.bf16 %v2175, %v2174
        %v2201 = vpack.c.bf16 %v2177, %v2176
        %v2202 = vpack.c.bf16 %v2179, %v2178
        %v2203 = vpack.c.bf16 %v2181, %v2180
        %v2204 = vpack.c.bf16 %v2183, %v2182
        %v2205 = vpack.c.bf16 %v2185, %v2184
        %v2206 = vpack.c.bf16 %v2187, %v2186
        %v2207 = vpack.c.bf16 %v2189, %v2188
        %v2208 = vpack.c.bf16 %v2191, %v2190
        %v2209 = vpack.c.bf16 %v2193, %v2192
        %s2210 = scalar_lea.vmem %s320, 16
        %v2211 = vld [vmem:[%s2210] sm:$0x3]
        %v2213 = vsel %vm393, %v2194, 0
        %v2216 = vsel %vm393, %v2195, 0
        %v2219 = vsel %vm393, %v2196, 0
        %v2222 = vsel %vm393, %v2197, 0
        %v2225 = vsel %vm393, %v2198, 0
        %v2228 = vsel %vm393, %v2199, 0
        %v2231 = vsel %vm393, %v2200, 0
        %v2234 = vsel %vm393, %v2201, 0
        %v2237 = vsel %vm393, %v2202, 0
        %v2240 = vsel %vm393, %v2203, 0
        %v2243 = vsel %vm393, %v2204, 0
        %v2246 = vsel %vm393, %v2205, 0
        %v2249 = vsel %vm393, %v2206, 0
        %v2252 = vsel %vm393, %v2207, 0
        %v2255 = vsel %vm393, %v2208, 0
        %v2258 = vsel %vm393, %v2209, 0
        %v2261 = vsel %vm597, %v2211, 0
        %2263 = vmatpush.bf16.msra.mxu0 0
        %2264 = vmatpush.bf16.msra.mxu0 0
        %2265 = vmatpush.bf16.msra.mxu0 0
        %2266 = vmatpush.bf16.msra.mxu0 0
        %2267 = vmatpush.bf16.msra.mxu0 0
        %2268 = vmatpush.bf16.msra.mxu0 0
        %2269 = vmatpush.bf16.msra.mxu0 0
        %2270 = vmatpush.bf16.msra.mxu0 %v2261
        %2271 = vmatmul.bf16.gmra.mxu0 %v2213
        %v2272 = vpop.f32.mrf.mxu0
        %v2273 = vadd.f32 0.0, %v2272
        %v2274 = vpop.f32.mrf.mxu0
        %v2275 = vadd.f32 0.0, %v2274
        %2276 = vmatmul.bf16.gmra.mxu0 %v2216
        %v2277 = vpop.f32.mrf.mxu0
        %v2278 = vadd.f32 0.0, %v2277
        %v2279 = vpop.f32.mrf.mxu0
        %v2280 = vadd.f32 0.0, %v2279
        %2281 = vmatmul.bf16.gmra.mxu0 %v2219
        %v2282 = vpop.f32.mrf.mxu0
        %v2283 = vadd.f32 0.0, %v2282
        %v2284 = vpop.f32.mrf.mxu0
        %v2285 = vadd.f32 0.0, %v2284
        %2286 = vmatmul.bf16.gmra.mxu0 %v2222
        %v2287 = vpop.f32.mrf.mxu0
        %v2288 = vadd.f32 0.0, %v2287
        %v2289 = vpop.f32.mrf.mxu0
        %v2290 = vadd.f32 0.0, %v2289
        %2291 = vmatmul.bf16.gmra.mxu0 %v2225
        %v2292 = vpop.f32.mrf.mxu0
        %v2293 = vadd.f32 0.0, %v2292
        %v2294 = vpop.f32.mrf.mxu0
        %v2295 = vadd.f32 0.0, %v2294
        %2296 = vmatmul.bf16.gmra.mxu0 %v2228
        %v2297 = vpop.f32.mrf.mxu0
        %v2298 = vadd.f32 0.0, %v2297
        %v2299 = vpop.f32.mrf.mxu0
        %v2300 = vadd.f32 0.0, %v2299
        %2301 = vmatmul.bf16.gmra.mxu0 %v2231
        %v2302 = vpop.f32.mrf.mxu0
        %v2303 = vadd.f32 0.0, %v2302
        %v2304 = vpop.f32.mrf.mxu0
        %v2305 = vadd.f32 0.0, %v2304
        %2306 = vmatmul.bf16.gmra.mxu0 %v2234
        %v2307 = vpop.f32.mrf.mxu0
        %v2308 = vadd.f32 0.0, %v2307
        %v2309 = vpop.f32.mrf.mxu0
        %v2310 = vadd.f32 0.0, %v2309
        %2311 = vmatmul.bf16.gmra.mxu0 %v2237
        %v2312 = vpop.f32.mrf.mxu0
        %v2313 = vadd.f32 0.0, %v2312
        %v2314 = vpop.f32.mrf.mxu0
        %v2315 = vadd.f32 0.0, %v2314
        %2316 = vmatmul.bf16.gmra.mxu0 %v2240
        %v2317 = vpop.f32.mrf.mxu0
        %v2318 = vadd.f32 0.0, %v2317
        %v2319 = vpop.f32.mrf.mxu0
        %v2320 = vadd.f32 0.0, %v2319
        %2321 = vmatmul.bf16.gmra.mxu0 %v2243
        %v2322 = vpop.f32.mrf.mxu0
        %v2323 = vadd.f32 0.0, %v2322
        %v2324 = vpop.f32.mrf.mxu0
        %v2325 = vadd.f32 0.0, %v2324
        %2326 = vmatmul.bf16.gmra.mxu0 %v2246
        %v2327 = vpop.f32.mrf.mxu0
        %v2328 = vadd.f32 0.0, %v2327
        %v2329 = vpop.f32.mrf.mxu0
        %v2330 = vadd.f32 0.0, %v2329
        %2331 = vmatmul.bf16.gmra.mxu0 %v2249
        %v2332 = vpop.f32.mrf.mxu0
        %v2333 = vadd.f32 0.0, %v2332
        %v2334 = vpop.f32.mrf.mxu0
        %v2335 = vadd.f32 0.0, %v2334
        %2336 = vmatmul.bf16.gmra.mxu0 %v2252
        %v2337 = vpop.f32.mrf.mxu0
        %v2338 = vadd.f32 0.0, %v2337
        %v2339 = vpop.f32.mrf.mxu0
        %v2340 = vadd.f32 0.0, %v2339
        %2341 = vmatmul.bf16.gmra.mxu0 %v2255
        %v2342 = vpop.f32.mrf.mxu0
        %v2343 = vadd.f32 0.0, %v2342
        %v2344 = vpop.f32.mrf.mxu0
        %v2345 = vadd.f32 0.0, %v2344
        %2346 = vmatmul.bf16.gmra.mxu0 %v2258
        %v2347 = vpop.f32.mrf.mxu0
        %v2348 = vadd.f32 0.0, %v2347
        %v2349 = vpop.f32.mrf.mxu0
        %v2350 = vadd.f32 0.0, %v2349
        %2351 = vdwg.mxu0
        %v2352 = vadd.f32 %v2130, %v2273
        %v2353 = vadd.f32 %v2131, %v2275
        %v2354 = vadd.f32 %v2132, %v2278
        %v2355 = vadd.f32 %v2133, %v2280
        %v2356 = vadd.f32 %v2134, %v2283
        %v2357 = vadd.f32 %v2135, %v2285
        %v2358 = vadd.f32 %v2136, %v2288
        %v2359 = vadd.f32 %v2137, %v2290
        %v2360 = vadd.f32 %v2138, %v2293
        %v2361 = vadd.f32 %v2139, %v2295
        %v2362 = vadd.f32 %v2140, %v2298
        %v2363 = vadd.f32 %v2141, %v2300
        %v2364 = vadd.f32 %v2142, %v2303
        %v2365 = vadd.f32 %v2143, %v2305
        %v2366 = vadd.f32 %v2144, %v2308
        %v2367 = vadd.f32 %v2145, %v2310
        %v2368 = vadd.f32 %v2146, %v2313
        %v2369 = vadd.f32 %v2147, %v2315
        %v2370 = vadd.f32 %v2148, %v2318
        %v2371 = vadd.f32 %v2149, %v2320
        %v2372 = vadd.f32 %v2150, %v2323
        %v2373 = vadd.f32 %v2151, %v2325
        %v2374 = vadd.f32 %v2152, %v2328
        %v2375 = vadd.f32 %v2153, %v2330
        %v2376 = vadd.f32 %v2154, %v2333
        %v2377 = vadd.f32 %v2155, %v2335
        %v2378 = vadd.f32 %v2156, %v2338
        %v2379 = vadd.f32 %v2157, %v2340
        %v2380 = vadd.f32 %v2158, %v2343
        %v2381 = vadd.f32 %v2159, %v2345
        %v2382 = vadd.f32 %v2160, %v2348
        %v2383 = vadd.f32 %v2161, %v2350
        %v2384 = vpack.c.bf16 %v2352, %v2352
        %v2385 = vpack.c.bf16 %v2353, %v2353
        %v2386 = vpack.c.bf16 %v2354, %v2354
        %v2387 = vpack.c.bf16 %v2355, %v2355
        %v2388 = vpack.c.bf16 %v2356, %v2356
        %v2389 = vpack.c.bf16 %v2357, %v2357
        %v2390 = vpack.c.bf16 %v2358, %v2358
        %v2391 = vpack.c.bf16 %v2359, %v2359
        %v2392 = vpack.c.bf16 %v2360, %v2360
        %v2393 = vpack.c.bf16 %v2361, %v2361
        %v2394 = vpack.c.bf16 %v2362, %v2362
        %v2395 = vpack.c.bf16 %v2363, %v2363
        %v2396 = vpack.c.bf16 %v2364, %v2364
        %v2397 = vpack.c.bf16 %v2365, %v2365
        %v2398 = vpack.c.bf16 %v2366, %v2366
        %v2399 = vpack.c.bf16 %v2367, %v2367
        %v2400 = vpack.c.bf16 %v2368, %v2368
        %v2401 = vpack.c.bf16 %v2369, %v2369
        %v2402 = vpack.c.bf16 %v2370, %v2370
        %v2403 = vpack.c.bf16 %v2371, %v2371
        %v2404 = vpack.c.bf16 %v2372, %v2372
        %v2405 = vpack.c.bf16 %v2373, %v2373
        %v2406 = vpack.c.bf16 %v2374, %v2374
        %v2407 = vpack.c.bf16 %v2375, %v2375
        %v2408 = vpack.c.bf16 %v2376, %v2376
        %v2409 = vpack.c.bf16 %v2377, %v2377
        %v2410 = vpack.c.bf16 %v2378, %v2378
        %v2411 = vpack.c.bf16 %v2379, %v2379
        %v2412 = vpack.c.bf16 %v2380, %v2380
        %v2413 = vpack.c.bf16 %v2381, %v2381
        %v2414 = vpack.c.bf16 %v2382, %v2382
        %v2415 = vpack.c.bf16 %v2383, %v2383
        %2416 = vst [vmem:[%s293] sm:$0xf] %v2384
        %2417 = vst [vmem:[%s293 + $0x4] sm:$0xf] %v2385
        %2418 = vst [vmem:[%s293 + $0x8] sm:$0xf] %v2386
        %2419 = vst [vmem:[%s293 + $0xc] sm:$0xf] %v2387
        %2420 = vst [vmem:[%s293 + $0x10] sm:$0xf] %v2388
        %2421 = vst [vmem:[%s293 + $0x14] sm:$0xf] %v2389
        %2422 = vst [vmem:[%s293 + $0x18] sm:$0xf] %v2390
        %2423 = vst [vmem:[%s293 + $0x1c] sm:$0xf] %v2391
        %2424 = vst [vmem:[%s293 + $0x20] sm:$0xf] %v2392
        %2425 = vst [vmem:[%s293 + $0x24] sm:$0xf] %v2393
        %2426 = vst [vmem:[%s293 + $0x28] sm:$0xf] %v2394
        %2427 = vst [vmem:[%s293 + $0x2c] sm:$0xf] %v2395
        %2428 = vst [vmem:[%s293 + $0x30] sm:$0xf] %v2396
        %2429 = vst [vmem:[%s293 + $0x34] sm:$0xf] %v2397
        %2430 = vst [vmem:[%s293 + $0x38] sm:$0xf] %v2398
        %2431 = vst [vmem:[%s293 + $0x3c] sm:$0xf] %v2399
        %2432 = vst [vmem:[%s293 + $0x40] sm:$0xf] %v2400
        %2433 = vst [vmem:[%s293 + $0x44] sm:$0xf] %v2401
        %2434 = vst [vmem:[%s293 + $0x48] sm:$0xf] %v2402
        %2435 = vst [vmem:[%s293 + $0x4c] sm:$0xf] %v2403
        %2436 = vst [vmem:[%s293 + $0x50] sm:$0xf] %v2404
        %2437 = vst [vmem:[%s293 + $0x54] sm:$0xf] %v2405
        %2438 = vst [vmem:[%s293 + $0x58] sm:$0xf] %v2406
        %2439 = vst [vmem:[%s293 + $0x5c] sm:$0xf] %v2407
        %2440 = vst [vmem:[%s293 + $0x60] sm:$0xf] %v2408
        %2441 = vst [vmem:[%s293 + $0x64] sm:$0xf] %v2409
        %2442 = vst [vmem:[%s293 + $0x68] sm:$0xf] %v2410
        %2443 = vst [vmem:[%s293 + $0x6c] sm:$0xf] %v2411
        %2444 = vst [vmem:[%s293 + $0x70] sm:$0xf] %v2412
        %2445 = vst [vmem:[%s293 + $0x74] sm:$0xf] %v2413
        %2446 = vst [vmem:[%s293 + $0x78] sm:$0xf] %v2414
        %2447 = vst [vmem:[%s293 + $0x7c] sm:$0xf] %v2415
        %v2448 = vld [vmem:[%s325] sm:$0xff]
        %v2449 = vld [vmem:[%s325 + $0x8] sm:$0xff]
        %v2450 = vld [vmem:[%s325 + $0x10] sm:$0xff]
        %v2451 = vld [vmem:[%s325 + $0x18] sm:$0xff]
        %v2452 = vld [vmem:[%s325 + $0x20] sm:$0xff]
        %v2453 = vld [vmem:[%s325 + $0x28] sm:$0xff]
        %v2454 = vld [vmem:[%s325 + $0x30] sm:$0xff]
        %v2455 = vld [vmem:[%s325 + $0x38] sm:$0xff]
        %v2456 = vld [vmem:[%s325 + $0x40] sm:$0xff]
        %v2457 = vld [vmem:[%s325 + $0x48] sm:$0xff]
        %v2458 = vld [vmem:[%s325 + $0x50] sm:$0xff]
        %v2459 = vld [vmem:[%s325 + $0x58] sm:$0xff]
        %v2460 = vld [vmem:[%s325 + $0x60] sm:$0xff]
        %v2461 = vld [vmem:[%s325 + $0x68] sm:$0xff]
        %v2462 = vld [vmem:[%s325 + $0x70] sm:$0xff]
        %v2463 = vld [vmem:[%s325 + $0x78] sm:$0xff]
        %v2464 = vld [vmem:[%s325 + $0x80] sm:$0xff]
        %v2465 = vld [vmem:[%s325 + $0x88] sm:$0xff]
        %v2466 = vld [vmem:[%s325 + $0x90] sm:$0xff]
        %v2467 = vld [vmem:[%s325 + $0x98] sm:$0xff]
        %v2468 = vld [vmem:[%s325 + $0xa0] sm:$0xff]
        %v2469 = vld [vmem:[%s325 + $0xa8] sm:$0xff]
        %v2470 = vld [vmem:[%s325 + $0xb0] sm:$0xff]
        %v2471 = vld [vmem:[%s325 + $0xb8] sm:$0xff]
        %v2472 = vld [vmem:[%s325 + $0xc0] sm:$0xff]
        %v2473 = vld [vmem:[%s325 + $0xc8] sm:$0xff]
        %v2474 = vld [vmem:[%s325 + $0xd0] sm:$0xff]
        %v2475 = vld [vmem:[%s325 + $0xd8] sm:$0xff]
        %v2476 = vld [vmem:[%s325 + $0xe0] sm:$0xff]
        %v2477 = vld [vmem:[%s325 + $0xe8] sm:$0xff]
        %v2478 = vld [vmem:[%s325 + $0xf0] sm:$0xff]
        %v2479 = vld [vmem:[%s325 + $0xf8] sm:$0xff]
        %2481 = vset.pattern.permute.xlu0 0
        %2482 = vperm.xlu0 %2481, %v2448
        %v2483 = vpop.permute.xlu0 %2482
        %2486 = vset.pattern.permute.xlu0 0
        %2487 = vperm.xlu0 %2486, %v2449
        %v2488 = vpop.permute.xlu0 %2487
        %2491 = vset.pattern.permute.xlu0 0
        %2492 = vperm.xlu0 %2491, %v2450
        %v2493 = vpop.permute.xlu0 %2492
        %2496 = vset.pattern.permute.xlu0 0
        %2497 = vperm.xlu0 %2496, %v2451
        %v2498 = vpop.permute.xlu0 %2497
        %2501 = vset.pattern.permute.xlu0 0
        %2502 = vperm.xlu0 %2501, %v2452
        %v2503 = vpop.permute.xlu0 %2502
        %2506 = vset.pattern.permute.xlu0 0
        %2507 = vperm.xlu0 %2506, %v2453
        %v2508 = vpop.permute.xlu0 %2507
        %2511 = vset.pattern.permute.xlu0 0
        %2512 = vperm.xlu0 %2511, %v2454
        %v2513 = vpop.permute.xlu0 %2512
        %2516 = vset.pattern.permute.xlu0 0
        %2517 = vperm.xlu0 %2516, %v2455
        %v2518 = vpop.permute.xlu0 %2517
        %2521 = vset.pattern.permute.xlu0 0
        %2522 = vperm.xlu0 %2521, %v2456
        %v2523 = vpop.permute.xlu0 %2522
        %2526 = vset.pattern.permute.xlu0 0
        %2527 = vperm.xlu0 %2526, %v2457
        %v2528 = vpop.permute.xlu0 %2527
        %2531 = vset.pattern.permute.xlu0 0
        %2532 = vperm.xlu0 %2531, %v2458
        %v2533 = vpop.permute.xlu0 %2532
        %2536 = vset.pattern.permute.xlu0 0
        %2537 = vperm.xlu0 %2536, %v2459
        %v2538 = vpop.permute.xlu0 %2537
        %2541 = vset.pattern.permute.xlu0 0
        %2542 = vperm.xlu0 %2541, %v2460
        %v2543 = vpop.permute.xlu0 %2542
        %2546 = vset.pattern.permute.xlu0 0
        %2547 = vperm.xlu0 %2546, %v2461
        %v2548 = vpop.permute.xlu0 %2547
        %2551 = vset.pattern.permute.xlu0 0
        %2552 = vperm.xlu0 %2551, %v2462
        %v2553 = vpop.permute.xlu0 %2552
        %2556 = vset.pattern.permute.xlu0 0
        %2557 = vperm.xlu0 %2556, %v2463
        %v2558 = vpop.permute.xlu0 %2557
        %2561 = vset.pattern.permute.xlu0 0
        %2562 = vperm.xlu0 %2561, %v2464
        %v2563 = vpop.permute.xlu0 %2562
        %2566 = vset.pattern.permute.xlu0 0
        %2567 = vperm.xlu0 %2566, %v2465
        %v2568 = vpop.permute.xlu0 %2567
        %2571 = vset.pattern.permute.xlu0 0
        %2572 = vperm.xlu0 %2571, %v2466
        %v2573 = vpop.permute.xlu0 %2572
        %2576 = vset.pattern.permute.xlu0 0
        %2577 = vperm.xlu0 %2576, %v2467
        %v2578 = vpop.permute.xlu0 %2577
        %2581 = vset.pattern.permute.xlu0 0
        %2582 = vperm.xlu0 %2581, %v2468
        %v2583 = vpop.permute.xlu0 %2582
        %2586 = vset.pattern.permute.xlu0 0
        %2587 = vperm.xlu0 %2586, %v2469
        %v2588 = vpop.permute.xlu0 %2587
        %2591 = vset.pattern.permute.xlu0 0
        %2592 = vperm.xlu0 %2591, %v2470
        %v2593 = vpop.permute.xlu0 %2592
        %2596 = vset.pattern.permute.xlu0 0
        %2597 = vperm.xlu0 %2596, %v2471
        %v2598 = vpop.permute.xlu0 %2597
        %2601 = vset.pattern.permute.xlu0 0
        %2602 = vperm.xlu0 %2601, %v2472
        %v2603 = vpop.permute.xlu0 %2602
        %2606 = vset.pattern.permute.xlu0 0
        %2607 = vperm.xlu0 %2606, %v2473
        %v2608 = vpop.permute.xlu0 %2607
        %2611 = vset.pattern.permute.xlu0 0
        %2612 = vperm.xlu0 %2611, %v2474
        %v2613 = vpop.permute.xlu0 %2612
        %2616 = vset.pattern.permute.xlu0 0
        %2617 = vperm.xlu0 %2616, %v2475
        %v2618 = vpop.permute.xlu0 %2617
        %2621 = vset.pattern.permute.xlu0 0
        %2622 = vperm.xlu0 %2621, %v2476
        %v2623 = vpop.permute.xlu0 %2622
        %2626 = vset.pattern.permute.xlu0 0
        %2627 = vperm.xlu0 %2626, %v2477
        %v2628 = vpop.permute.xlu0 %2627
        %2631 = vset.pattern.permute.xlu0 0
        %2632 = vperm.xlu0 %2631, %v2478
        %v2633 = vpop.permute.xlu0 %2632
        %2636 = vset.pattern.permute.xlu0 0
        %2637 = vperm.xlu0 %2636, %v2479
        %v2638 = vpop.permute.xlu0 %2637
        %v2640 = vmul.f32 %v2352, %v2483
        %v2641 = vmul.f32 %v2353, %v2488
        %v2642 = vmul.f32 %v2354, %v2493
        %v2643 = vmul.f32 %v2355, %v2498
        %v2644 = vmul.f32 %v2356, %v2503
        %v2645 = vmul.f32 %v2357, %v2508
        %v2646 = vmul.f32 %v2358, %v2513
        %v2647 = vmul.f32 %v2359, %v2518
        %v2648 = vmul.f32 %v2360, %v2523
        %v2649 = vmul.f32 %v2361, %v2528
        %v2650 = vmul.f32 %v2362, %v2533
        %v2651 = vmul.f32 %v2363, %v2538
        %v2652 = vmul.f32 %v2364, %v2543
        %v2653 = vmul.f32 %v2365, %v2548
        %v2654 = vmul.f32 %v2366, %v2553
        %v2655 = vmul.f32 %v2367, %v2558
        %v2656 = vmul.f32 %v2368, %v2563
        %v2657 = vmul.f32 %v2369, %v2568
        %v2658 = vmul.f32 %v2370, %v2573
        %v2659 = vmul.f32 %v2371, %v2578
        %v2660 = vmul.f32 %v2372, %v2583
        %v2661 = vmul.f32 %v2373, %v2588
        %v2662 = vmul.f32 %v2374, %v2593
        %v2663 = vmul.f32 %v2375, %v2598
        %v2664 = vmul.f32 %v2376, %v2603
        %v2665 = vmul.f32 %v2377, %v2608
        %v2666 = vmul.f32 %v2378, %v2613
        %v2667 = vmul.f32 %v2379, %v2618
        %v2668 = vmul.f32 %v2380, %v2623
        %v2669 = vmul.f32 %v2381, %v2628
        %v2670 = vmul.f32 %v2382, %v2633
        %v2671 = vmul.f32 %v2383, %v2638
        %v2672 = vadd.f32 %v2640, %v2641
        %v2673 = vadd.f32 %v2672, %v2642
        %v2674 = vadd.f32 %v2673, %v2643
        %v2675 = vadd.f32 %v2674, %v2644
        %v2676 = vadd.f32 %v2675, %v2645
        %v2677 = vadd.f32 %v2676, %v2646
        %v2678 = vadd.f32 %v2677, %v2647
        %v2679 = vadd.f32 %v2678, %v2648
        %v2680 = vadd.f32 %v2679, %v2649
        %v2681 = vadd.f32 %v2680, %v2650
        %v2682 = vadd.f32 %v2681, %v2651
        %v2683 = vadd.f32 %v2682, %v2652
        %v2684 = vadd.f32 %v2683, %v2653
        %v2685 = vadd.f32 %v2684, %v2654
        %v2686 = vadd.f32 %v2685, %v2655
        %v2687 = vadd.f32 %v2686, %v2656
        %v2688 = vadd.f32 %v2687, %v2657
        %v2689 = vadd.f32 %v2688, %v2658
        %v2690 = vadd.f32 %v2689, %v2659
        %v2691 = vadd.f32 %v2690, %v2660
        %v2692 = vadd.f32 %v2691, %v2661
        %v2693 = vadd.f32 %v2692, %v2662
        %v2694 = vadd.f32 %v2693, %v2663
        %v2695 = vadd.f32 %v2694, %v2664
        %v2696 = vadd.f32 %v2695, %v2665
        %v2697 = vadd.f32 %v2696, %v2666
        %v2698 = vadd.f32 %v2697, %v2667
        %v2699 = vadd.f32 %v2698, %v2668
        %v2700 = vadd.f32 %v2699, %v2669
        %v2701 = vadd.f32 %v2700, %v2670
        %v2702 = vadd.f32 %v2701, %v2671
        %v2703 = vrot.slane %v2702, 4
        %v2704 = vadd.f32 %v2702, %v2703
        %v2705 = vrot.slane %v2704, 2
        %v2706 = vadd.f32 %v2704, %v2705
        %v2707 = vrot.slane %v2706, 1
        %v2708 = vadd.f32 %v2706, %v2707
        %2709 = vst [vmem:[%s300] sm:$0x1] %v2708
        %v2710 = vmul.f32 %v2640, %v2352
        %v2711 = vmul.f32 %v2641, %v2353
        %v2712 = vmul.f32 %v2642, %v2354
        %v2713 = vmul.f32 %v2643, %v2355
        %v2714 = vmul.f32 %v2644, %v2356
        %v2715 = vmul.f32 %v2645, %v2357
        %v2716 = vmul.f32 %v2646, %v2358
        %v2717 = vmul.f32 %v2647, %v2359
        %v2718 = vmul.f32 %v2648, %v2360
        %v2719 = vmul.f32 %v2649, %v2361
        %v2720 = vmul.f32 %v2650, %v2362
        %v2721 = vmul.f32 %v2651, %v2363
        %v2722 = vmul.f32 %v2652, %v2364
        %v2723 = vmul.f32 %v2653, %v2365
        %v2724 = vmul.f32 %v2654, %v2366
        %v2725 = vmul.f32 %v2655, %v2367
        %v2726 = vmul.f32 %v2656, %v2368
        %v2727 = vmul.f32 %v2657, %v2369
        %v2728 = vmul.f32 %v2658, %v2370
        %v2729 = vmul.f32 %v2659, %v2371
        %v2730 = vmul.f32 %v2660, %v2372
        %v2731 = vmul.f32 %v2661, %v2373
        %v2732 = vmul.f32 %v2662, %v2374
        %v2733 = vmul.f32 %v2663, %v2375
        %v2734 = vmul.f32 %v2664, %v2376
        %v2735 = vmul.f32 %v2665, %v2377
        %v2736 = vmul.f32 %v2666, %v2378
        %v2737 = vmul.f32 %v2667, %v2379
        %v2738 = vmul.f32 %v2668, %v2380
        %v2739 = vmul.f32 %v2669, %v2381
        %v2740 = vmul.f32 %v2670, %v2382
        %v2741 = vmul.f32 %v2671, %v2383
        %v2742 = vadd.f32 %v2710, %v2711
        %v2743 = vadd.f32 %v2742, %v2712
        %v2744 = vadd.f32 %v2743, %v2713
        %v2745 = vadd.f32 %v2744, %v2714
        %v2746 = vadd.f32 %v2745, %v2715
        %v2747 = vadd.f32 %v2746, %v2716
        %v2748 = vadd.f32 %v2747, %v2717
        %v2749 = vadd.f32 %v2748, %v2718
        %v2750 = vadd.f32 %v2749, %v2719
        %v2751 = vadd.f32 %v2750, %v2720
        %v2752 = vadd.f32 %v2751, %v2721
        %v2753 = vadd.f32 %v2752, %v2722
        %v2754 = vadd.f32 %v2753, %v2723
        %v2755 = vadd.f32 %v2754, %v2724
        %v2756 = vadd.f32 %v2755, %v2725
        %v2757 = vadd.f32 %v2756, %v2726
        %v2758 = vadd.f32 %v2757, %v2727
        %v2759 = vadd.f32 %v2758, %v2728
        %v2760 = vadd.f32 %v2759, %v2729
        %v2761 = vadd.f32 %v2760, %v2730
        %v2762 = vadd.f32 %v2761, %v2731
        %v2763 = vadd.f32 %v2762, %v2732
        %v2764 = vadd.f32 %v2763, %v2733
        %v2765 = vadd.f32 %v2764, %v2734
        %v2766 = vadd.f32 %v2765, %v2735
        %v2767 = vadd.f32 %v2766, %v2736
        %v2768 = vadd.f32 %v2767, %v2737
        %v2769 = vadd.f32 %v2768, %v2738
        %v2770 = vadd.f32 %v2769, %v2739
        %v2771 = vadd.f32 %v2770, %v2740
        %v2772 = vadd.f32 %v2771, %v2741
        %v2773 = vrot.slane %v2772, 4
        %v2774 = vadd.f32 %v2772, %v2773
        %v2775 = vrot.slane %v2774, 2
        %v2776 = vadd.f32 %v2774, %v2775
        %v2777 = vrot.slane %v2776, 1
        %v2778 = vadd.f32 %v2776, %v2777
        %2779 = vst [vmem:[%s300 + $0x1] sm:$0x1] %v2778
        %s2780 = sand.u32 %s153, 1
        %s2781 = scalar_lea.sflag [#allocation4], %s2780
        %s2782 = sand.u32 %s153, 1
        %s2783 = smul.addr %s2782, 128
        %s2784 = scalar_lea.vmem [#allocation3], %s2783
        %s2785 = sand.u32 %s181, 1
        %s2786 = scalar_lea.sflag [#allocation6], %s2785
        %s2787 = sand.u32 %s181, 1
        %s2788 = smul.addr %s2787, 2
        %s2789 = scalar_lea.vmem [#allocation5], %s2788
        // Predicated region
        $region37: #{tpu_custom_call.1} parent=35 // pred_check
          %p2790 = pneg %p163
        $region38: #{tpu_custom_call.1} parent=35 // pred_check_branch
          %2792 = sbr.rel (%p2790) target = $region40
        $region39: #{tpu_custom_call.1} parent=35 // pred_region
          %s2793 = smul.u32 32, %s27
          %2795 = vsyncadd %s2781, 0
          %s2796 = sadd.s32 %s28, %s2793
          %s2797 = smul.addr %s2796, 4
          %s2798 = scalar_lea.hbm %s4, %s2797
          %s2799 = sshll.u32 %s2784, 4
          %s2800 = int_to_ptr.vmem [resolvable:$true] %s2799
          %s2801 = sshll.u32 %s2798, 4
          %s2802 = int_to_ptr.hbm [resolvable:$true] %s2801
          %2807 = dma.vmem_to_hbm [thread:$0]  %s2800, 2048, %s2802, %s2781, 64, 64, 4
        $region40: #{tpu_custom_call.1} parent=35 // pred_fallthru
          _
        // Predicated region
        $region41: #{tpu_custom_call.1} parent=35 // pred_check
          %p2808 = pneg %p191
        $region42: #{tpu_custom_call.1} parent=35 // pred_check_branch
          %2810 = sbr.rel (%p2808) target = $region44
        $region43: #{tpu_custom_call.1} parent=35 // pred_region
          %2812 = vsyncadd %s2786, 0
          %s2813 = sadd.s32 %s28, %s27
          %s2814 = smul.addr %s2813, 2
          %s2815 = scalar_lea.hbm %s5, %s2814
          %s2817 = sshll.u32 %s2789, 4
          %s2818 = int_to_ptr.vmem [resolvable:$true] %s2817
          %s2819 = sshll.u32 %s2815, 4
          %s2820 = int_to_ptr.hbm [resolvable:$true] %s2819
          %2822 = dma.vmem_to_hbm [thread:$0]  %s2818, 32, %s2820, %s2786
        $region44: #{tpu_custom_call.1} parent=35 // pred_fallthru
          _
      $region36: #{tpu_custom_call.1} parent=5 // pred_fallthru
        _
      %p2823 = scmp.le.s32.totalorder 2, %s18
      // Predicated region
      $region45: #{tpu_custom_call.1} parent=5 // pred_check
        %p2824 = pneg %p2823
      $region46: #{tpu_custom_call.1} parent=5 // pred_check_branch
        %2826 = sbr.rel (%p2824) target = $region48
      $region47: #{tpu_custom_call.1} parent=5 // pred_region
        %s2827 = ssub.s32 %s18, 2
        // Predicated region
        $region49: #{tpu_custom_call.1} parent=47 // pred_check
          %p2828 = pneg %p169
        $region50: #{tpu_custom_call.1} parent=47 // pred_check_branch
          %2830 = sbr.rel (%p2828) target = $region52
        $region51: #{tpu_custom_call.1} parent=47 // pred_region
          %s2831 = sand.u32 %s154, 1
          %s2832 = scalar_lea.sflag [#allocation4], %s2831
          %s2833 = sand.u32 %s154, 1
          %s2834 = smul.addr %s2833, 128
          %s2835 = scalar_lea.vmem [#allocation3], %s2834
          %2837 = dma.done %s2832, 2048
        $region52: #{tpu_custom_call.1} parent=47 // pred_fallthru
          _
        // Predicated region
        $region53: #{tpu_custom_call.1} parent=47 // pred_check
          %p2838 = pneg %p197
        $region54: #{tpu_custom_call.1} parent=47 // pred_check_branch
          %2840 = sbr.rel (%p2838) target = $region56
        $region55: #{tpu_custom_call.1} parent=47 // pred_region
          %s2841 = sand.u32 %s182, 1
          %s2842 = scalar_lea.sflag [#allocation6], %s2841
          %s2843 = sand.u32 %s182, 1
          %s2844 = smul.addr %s2843, 2
          %s2845 = scalar_lea.vmem [#allocation5], %s2844
          %2847 = dma.done %s2842, 32
        $region56: #{tpu_custom_call.1} parent=47 // pred_fallthru
          _
      $region48: #{tpu_custom_call.1} parent=5 // pred_fallthru
        _
    $region6: #{tpu_custom_call.1} parent=1 // loop_footer
      %s22 = sadd.s32 1, %s18
    $region7: #{tpu_custom_call.1} parent=1 // loop_footer_branch
      %17 = sbr.rel target = $region3
    $region8: #{tpu_custom_call.1} parent=1 // loop_exit
      _
    %2848 = vsyncpa [#allocation4], 1
    %s2849 = scalar_lea.sflag [#allocation4], 1
    %2850 = vsyncpa %s2849, 1
    %2851 = vsyncpa [#allocation6], 1
    %s2852 = scalar_lea.sflag [#allocation6], 1
    %2853 = vsyncpa %s2852, 1

</llo_original>
